<compile_context>
chip_gen: v6e
topology: v6e:2x2x1
jax: 0.10.0
libtpu: 0.0.40
codegen_flags: <defaults>
</compile_context>

<pallas_src>
import math
import functools

import jax
import jax.numpy as jnp
from jax.experimental import pallas as pl
from jax.experimental.pallas import tpu as pltpu


def _self_attn_kernel(x_ref, wq_ref, bq_ref, wkv_ref, bkv_ref, mask_ref,
                      ctx_ref, *rest, num_heads, head_size, with_scores):
    """One (batch, query-tile) grid step.

    x_ref    : (1, S, H)   full sequence (queries are sliced out of this block)
    wq_ref   : (H, A)      fused Q weights, A = nh*hd
    bq_ref   : (1, A)      f32
    wkv_ref  : (H, 2A)     fused [K | V] weights
    bkv_ref  : (1, 2A)     f32
    mask_ref : (1, 1, S)   additive attention mask (f32)
    ctx_ref  : (1, TQ, A)
    rest     : (score_ref?, k_scratch, v_scratch); score_ref iff with_scores.
    """
    if with_scores:
        score_ref, k_ref, v_ref = rest
    else:
        k_ref, v_ref = rest

    A = num_heads * head_size
    tq = ctx_ref.shape[1]
    scale = 1.0 / math.sqrt(head_size)
    compute_dtype = x_ref.dtype
    qi = pl.program_id(1)

    # ---- K/V projection: once per batch row (q-tile axis is innermost and
    # "arbitrary"), cached in VMEM scratch in the compute dtype.
    @pl.when(qi == 0)
    def _():
        kv32 = jnp.dot(x_ref[0], wkv_ref[...],
                       preferred_element_type=jnp.float32)
        kv32 = kv32 + bkv_ref[...].astype(jnp.float32)
        k_ref[...] = kv32[:, :A].astype(compute_dtype)
        v_ref[...] = kv32[:, A:].astype(compute_dtype)

    # ---- Q projection for this query tile only, sliced from the resident
    # full-sequence block (no separate query DMA stream).
    row0 = pl.multiple_of(qi * tq, tq)
    x_q = x_ref[0, pl.ds(row0, tq), :]                              # (TQ, H)
    q32 = jnp.dot(x_q, wq_ref[...], preferred_element_type=jnp.float32)
    q32 = (q32 + bq_ref[...].astype(jnp.float32)) * scale           # fold 1/sqrt(hd)
    q = q32.astype(compute_dtype)                                   # (TQ, A)

    k = k_ref[...]                                                  # (S, A)
    v = v_ref[...]                                                  # (S, A)

    # ---- Per-head QK^T (nh small, static unroll), stacked to one lane-dense
    # (nh, TQ, S) slab so mask-add / softmax / writeback are single wide ops.
    scores_heads = []
    for h in range(num_heads):
        sl = slice(h * head_size, (h + 1) * head_size)
        scores_heads.append(
            jnp.einsum('qd,kd->qk', q[:, sl], k[:, sl],
                       preferred_element_type=jnp.float32))          # (TQ, S)
    s_all = jnp.stack(scores_heads, axis=0)                          # (nh, TQ, S)
    s_all = s_all + mask_ref[0].astype(jnp.float32)[None]            # masked, pre-softmax

    # Numerically stable softmax; denominator reciprocal on the EUP slot
    # (approx) + one Newton step so f32 numerics still track the reference.
    m = jnp.max(s_all, axis=-1, keepdims=True)
    e = jnp.exp(s_all - m)
    d = jnp.sum(e, axis=-1, keepdims=True)
    inv = pl.reciprocal(d, approx=True)
    inv = inv * (2.0 - d * inv)
    p_all = (e * inv).astype(compute_dtype)                          # (nh, TQ, S)
    # TODO(synk): attention-probs dropout and head_mask are treated as
    # identity (eval mode / head_mask=None); cross-attention path not emitted.

    ctx_heads = []
    for h in range(num_heads):
        sl = slice(h * head_size, (h + 1) * head_size)
        ctx_heads.append(jnp.dot(p_all[h], v[:, sl],
                                 preferred_element_type=jnp.float32))

    # Single lane-dense writebacks (no per-head masked partial stores).
    ctx_ref[0] = jnp.concatenate(ctx_heads, axis=-1).astype(ctx_ref.dtype)
    if with_scores:
        score_ref[0] = s_all.astype(score_ref.dtype)


def costeff_self_attention(hidden_states, wq, bq, wk, bk, wv, bv,
                           attention_mask=None, *, output_attentions=True,
                           q_tile=None):
    """Returns (context_layer, attention_scores) or (context_layer,)."""
    B, S, H = hidden_states.shape
    nh, _, hd = wq.shape
    A = nh * hd
    dtype = hidden_states.dtype

    # Fuse per-head weights into lane-dense slabs on the host:
    #   W_q[:, h*hd + d] == wq[h, :, d];  W_kv = [K | V].
    w_q = jnp.transpose(wq, (1, 0, 2)).reshape(H, A).astype(dtype)
    w_kv = jnp.concatenate(
        [jnp.transpose(wk, (1, 0, 2)).reshape(H, A),
         jnp.transpose(wv, (1, 0, 2)).reshape(H, A)], axis=-1).astype(dtype)
    b_q = bq.reshape(1, A).astype(jnp.float32)
    b_kv = jnp.concatenate([bk.reshape(1, A), bv.reshape(1, A)],
                           axis=-1).astype(jnp.float32)

    if attention_mask is None:
        mask = jnp.zeros((B, 1, S), dtype=jnp.float32)
    else:
        mask = attention_mask.reshape(B, 1, S).astype(jnp.float32)

    # Query-tile grid axis bounds the f32 scores block (nh*TQ*S*4 bytes) so the
    # kernel scales to realistic sequence lengths and fits v7x's 64 MiB VMEM.
    if q_tile is None:
        q_tile = min(S, 256)
    if S % q_tile != 0 or (q_tile != S and q_tile % 8 != 0):
        q_tile = S
    num_q = S // q_tile

    kernel = functools.partial(_self_attn_kernel, num_heads=nh, head_size=hd,
                               with_scores=output_attentions)

    in_specs = [
        pl.BlockSpec((1, S, H), lambda b, q: (b, 0, 0)),     # full sequence (resident per b)
        pl.BlockSpec((H, A), lambda b, q: (0, 0)),           # W_q
        pl.BlockSpec((1, A), lambda b, q: (0, 0)),           # b_q
        pl.BlockSpec((H, 2 * A), lambda b, q: (0, 0)),       # W_kv
        pl.BlockSpec((1, 2 * A), lambda b, q: (0, 0)),       # b_kv
        pl.BlockSpec((1, 1, S), lambda b, q: (b, 0, 0)),     # additive mask
    ]

    ctx_shape = jax.ShapeDtypeStruct((B, S, A), dtype)
    ctx_spec = pl.BlockSpec((1, q_tile, A), lambda b, q: (b, q, 0))

    if output_attentions:
        out_shape = (ctx_shape, jax.ShapeDtypeStruct((B, nh, S, S), dtype))
        out_specs = (ctx_spec,
                     pl.BlockSpec((1, nh, q_tile, S), lambda b, q: (b, 0, q, 0)))
    else:
        out_shape = ctx_shape
        out_specs = ctx_spec

    scratch_shapes = [pltpu.VMEM((S, A), dtype),             # cached K
                      pltpu.VMEM((S, A), dtype)]             # cached V

    itemsize = jnp.dtype(dtype).itemsize
    flops = 2 * B * S * H * 3 * A + 4 * B * S * S * A
    bytes_accessed = ((B * S * H + 3 * H * A + B * S * A) * itemsize
                      + 3 * A * 4 + B * S * 4
                      + (B * nh * S * S * itemsize if output_attentions else 0))
    cost = pl.CostEstimate(flops=flops,
                           transcendentals=B * nh * S * S,
                           bytes_accessed=bytes_accessed)

    out = pl.pallas_call(
        kernel,
        out_shape=out_shape,
        grid=(B, num_q),
        in_specs=in_specs,
        out_specs=out_specs,
        scratch_shapes=scratch_shapes,
        compiler_params=pltpu.CompilerParams(
            # Batch axis is megacore-shardable; the q axis carries the cached
            # K/V scratch so it must stay sequential ("arbitrary").
            dimension_semantics=("parallel", "arbitrary"),
            # Raised above the 16/32 MiB scoped default so large query tiles
            # stay double-buffered; kept under v7x's 64 MiB physical VMEM.
            vmem_limit_bytes=48 * 1024 * 1024),
        cost_estimate=cost,
    )(hidden_states, w_q, b_q, w_kv, b_kv, mask)

    if output_attentions:
        return out
    return (out,)


def _reference(hidden_states, wq, bq, wk, bk, wv, bv, attention_mask):
    """Pure-JAX reference mirroring the PyTorch forward (eval mode)."""
    B, S, H = hidden_states.shape
    nh, _, hd = wq.shape

    def proj(w, b):  # (B,S,H) @ (nh,H,hd) -> (B,nh,S,hd)
        return jnp.einsum('bsh,nhd->bnsd', hidden_states, w) + b[None, :, None, :]

    q, k, v = proj(wq, bq), proj(wk, bk), proj(wv, bv)
    scores = jnp.einsum('bnqd,bnkd->bnqk', q, k) / math.sqrt(hd)
    scores = scores + attention_mask.reshape(B, 1, 1, S)
    probs = jax.nn.softmax(scores, axis=-1)
    ctx = jnp.einsum('bnqk,bnkd->bnqd', probs, v)
    ctx = jnp.transpose(ctx, (0, 2, 1, 3)).reshape(B, S, nh * hd)
    return ctx, scores


if __name__ == "__main__":
    # config: hidden_size=32, prun_hidden_size=16, num_attention_heads=4 -> head_size=4
    B, S, H = 2, 8, 32
    NH, HD = 4, 4
    A = NH * HD

    key = jax.random.PRNGKey(0)
    ks = jax.random.split(key, 8)
    hidden_states = jax.random.normal(ks[0], (B, S, H), dtype=jnp.float32)

    # deterministic parameter init (synthetic, not a checkpoint)
    wq = (0.02 * jax.random.normal(ks[1], (NH, H, HD))).astype(jnp.float32)
    wk = (0.02 * jax.random.normal(ks[2], (NH, H, HD))).astype(jnp.float32)
    wv = (0.02 * jax.random.normal(ks[3], (NH, H, HD))).astype(jnp.float32)
    bq = (0.02 * jax.random.normal(ks[4], (NH, HD))).astype(jnp.float32)
    bk = (0.02 * jax.random.normal(ks[5], (NH, HD))).astype(jnp.float32)
    bv = (0.02 * jax.random.normal(ks[6], (NH, HD))).astype(jnp.float32)

    # HuggingFace-style additive mask: batch 1 has its last 2 key positions masked
    pad = jnp.array([[1.0] * S, [1.0] * (S - 2) + [0.0] * 2], dtype=jnp.float32)
    attention_mask = ((1.0 - pad) * -10000.0).reshape(B, 1, S)

    ctx, scores = costeff_self_attention(
        hidden_states, wq, bq, wk, bk, wv, bv, attention_mask,
        output_attentions=True)
    (ctx_only,) = costeff_self_attention(
        hidden_states, wq, bq, wk, bk, wv, bv, attention_mask,
        output_attentions=False)
    ctx, scores, ctx_only = jax.block_until_ready((ctx, scores, ctx_only))

    ctx_ref, scores_ref = _reference(
        hidden_states, wq, bq, wk, bk, wv, bv, attention_mask)

    assert ctx.shape == (B, S, A) and scores.shape == (B, NH, S, S)
    assert ctx_only.shape == (B, S, A)
    assert jnp.allclose(scores, scores_ref, atol=1e-5, rtol=1e-5)
    # ctx tolerance slightly relaxed for the EUP-approx reciprocal (+ Newton step).
    assert jnp.allclose(ctx, ctx_ref, atol=1e-4, rtol=1e-4)
    assert jnp.allclose(ctx_only, ctx_ref, atol=1e-4, rtol=1e-4)

    print("KERNEL_OK")
</pallas_src>

<mosaic_0001>
module attributes {stable_mosaic.version = 11 : i64} {
  func.func @_self_attn_kernel(%arg0: i32, %arg1: i32, %arg2: memref<1x8x32xf32, #tpu.memory_space<vmem>>, %arg3: memref<32x16xf32, #tpu.memory_space<vmem>>, %arg4: memref<1x16xf32, #tpu.memory_space<vmem>>, %arg5: memref<32x32xf32, #tpu.memory_space<vmem>>, %arg6: memref<1x32xf32, #tpu.memory_space<vmem>>, %arg7: memref<1x1x8xf32, #tpu.memory_space<vmem>>, %arg8: memref<1x8x16xf32, #tpu.memory_space<vmem>>, %arg9: memref<1x4x8x8xf32, #tpu.memory_space<vmem>>, %arg10: memref<8x16xf32, #tpu.memory_space<vmem>>, %arg11: memref<8x16xf32, #tpu.memory_space<vmem>>) attributes {dimension_semantics = [#tpu.dimension_semantics<parallel>, #tpu.dimension_semantics<arbitrary>], iteration_bounds = array<i64: 2, 1>, scalar_prefetch = 0 : i64, scratch_operands = 2 : i64, tpu.core_type = #tpu.core_type<tc>, window_params = [{transform_indices = @transform_0, window_bounds = array<i64: 1, 8, 32>}, {pipeline_mode = #tpu.pipeline_mode<synchronous>, transform_indices = @transform_1, window_bounds = array<i64: 32, 16>}, {pipeline_mode = #tpu.pipeline_mode<synchronous>, transform_indices = @transform_2, window_bounds = array<i64: 1, 16>}, {pipeline_mode = #tpu.pipeline_mode<synchronous>, transform_indices = @transform_3, window_bounds = array<i64: 32, 32>}, {pipeline_mode = #tpu.pipeline_mode<synchronous>, transform_indices = @transform_4, window_bounds = array<i64: 1, 32>}, {transform_indices = @transform_5, window_bounds = array<i64: 1, 1, 8>}, {transform_indices = @transform_6, window_bounds = array<i64: 1, 8, 16>}, {transform_indices = @transform_7, window_bounds = array<i64: 1, 4, 8, 8>}]} {
    %c0_i32 = arith.constant 0 : i32
    %0 = arith.cmpi eq, %arg1, %c0_i32 : i32
    %1 = arith.extui %0 : i1 to i32
    %c0_i32_0 = arith.constant 0 : i32
    %2 = arith.cmpi ne, %1, %c0_i32_0 : i32
    scf.if %2 {
      %c0_32 = arith.constant 0 : index
      %c0_33 = arith.constant 0 : index
      %c0_34 = arith.constant 0 : index
      %76 = vector.load %arg2[%c0_32, %c0_33, %c0_34] : memref<1x8x32xf32, #tpu.memory_space<vmem>>, vector<1x8x32xf32>
      %77 = vector.shape_cast %76 : vector<1x8x32xf32> to vector<8x32xf32>
      %c0_35 = arith.constant 0 : index
      %c0_36 = arith.constant 0 : index
      %78 = vector.load %arg5[%c0_35, %c0_36] : memref<32x32xf32, #tpu.memory_space<vmem>>, vector<32x32xf32>
      %cst_37 = arith.constant dense<0.000000e+00> : vector<8x32xf32>
      %79 = tpu.matmul %77, %78, %cst_37 {dimension_numbers = #tpu.dot_dimension_numbers<[1], [0], [0], [1], [0, 0, 1, 1], [], []>} : vector<8x32xf32>, vector<32x32xf32>, vector<8x32xf32> -> vector<8x32xf32>
      %c0_38 = arith.constant 0 : index
      %c0_39 = arith.constant 0 : index
      %80 = vector.load %arg6[%c0_38, %c0_39] : memref<1x32xf32, #tpu.memory_space<vmem>>, vector<1x32xf32>
      %81 = vector.broadcast %80 : vector<1x32xf32> to vector<8x32xf32>
      %82 = arith.addf %79, %81 : vector<8x32xf32>
      %83 = vector.extract_strided_slice %82 {offsets = [0, 0], sizes = [8, 16], strides = [1, 1]} : vector<8x32xf32> to vector<8x16xf32>
      %c0_40 = arith.constant 0 : index
      %c0_41 = arith.constant 0 : index
      %84 = vector.load %arg10[%c0_40, %c0_41] : memref<8x16xf32, #tpu.memory_space<vmem>>, vector<8x16xf32>
      tpu.vector_store %arg10[%c0_40, %c0_41], %83 {strides = array<i32>} : memref<8x16xf32, #tpu.memory_space<vmem>>, vector<8x16xf32>,
      %85 = vector.extract_strided_slice %82 {offsets = [0, 16], sizes = [8, 16], strides = [1, 1]} : vector<8x32xf32> to vector<8x16xf32>
      %c0_42 = arith.constant 0 : index
      %c0_43 = arith.constant 0 : index
      %86 = vector.load %arg11[%c0_42, %c0_43] : memref<8x16xf32, #tpu.memory_space<vmem>>, vector<8x16xf32>
      tpu.vector_store %arg11[%c0_42, %c0_43], %85 {strides = array<i32>} : memref<8x16xf32, #tpu.memory_space<vmem>>, vector<8x16xf32>,
    } else {
    }
    %c8_i32 = arith.constant 8 : i32
    %3 = arith.muli %arg1, %c8_i32 : i32
    %4 = tpu.assume_multiple %3, 8 : i32
    %c0 = arith.constant 0 : index
    %5 = arith.index_cast %4 : i32 to index
    %c0_1 = arith.constant 0 : index
    %6 = vector.load %arg2[%c0, %5, %c0_1] : memref<1x8x32xf32, #tpu.memory_space<vmem>>, vector<1x8x32xf32>
    %7 = vector.shape_cast %6 : vector<1x8x32xf32> to vector<8x32xf32>
    %c0_2 = arith.constant 0 : index
    %c0_3 = arith.constant 0 : index
    %8 = vector.load %arg3[%c0_2, %c0_3] : memref<32x16xf32, #tpu.memory_space<vmem>>, vector<32x16xf32>
    %cst = arith.constant dense<0.000000e+00> : vector<8x16xf32>
    %9 = tpu.matmul %7, %8, %cst {dimension_numbers = #tpu.dot_dimension_numbers<[1], [0], [0], [1], [0, 0, 1, 1], [], []>} : vector<8x32xf32>, vector<32x16xf32>, vector<8x16xf32> -> vector<8x16xf32>
    %c0_4 = arith.constant 0 : index
    %c0_5 = arith.constant 0 : index
    %10 = vector.load %arg4[%c0_4, %c0_5] : memref<1x16xf32, #tpu.memory_space<vmem>>, vector<1x16xf32>
    %11 = vector.broadcast %10 : vector<1x16xf32> to vector<8x16xf32>
    %12 = arith.addf %9, %11 : vector<8x16xf32>
    %cst_6 = arith.constant 5.000000e-01 : f32
    %13 = vector.broadcast %cst_6 : f32 to vector<8x16xf32>
    %14 = arith.mulf %12, %13 : vector<8x16xf32>
    %c0_7 = arith.constant 0 : index
    %c0_8 = arith.constant 0 : index
    %15 = vector.load %arg10[%c0_7, %c0_8] : memref<8x16xf32, #tpu.memory_space<vmem>>, vector<8x16xf32>
    %c0_9 = arith.constant 0 : index
    %c0_10 = arith.constant 0 : index
    %16 = vector.load %arg11[%c0_9, %c0_10] : memref<8x16xf32, #tpu.memory_space<vmem>>, vector<8x16xf32>
    %17 = vector.extract_strided_slice %14 {offsets = [0, 0], sizes = [8, 4], strides = [1, 1]} : vector<8x16xf32> to vector<8x4xf32>
    %18 = vector.extract_strided_slice %15 {offsets = [0, 0], sizes = [8, 4], strides = [1, 1]} : vector<8x16xf32> to vector<8x4xf32>
    "tpu.trace_start"() <{level = 10 : i32, message = "qd,kd->qk"}> : () -> ()
    %cst_11 = arith.constant dense<0.000000e+00> : vector<8x8xf32>
    %19 = tpu.matmul %17, %18, %cst_11 {dimension_numbers = #tpu.dot_dimension_numbers<[1], [1], [0], [0], [0, 0, 1, 0], [], []>} : vector<8x4xf32>, vector<8x4xf32>, vector<8x8xf32> -> vector<8x8xf32>
    "tpu.trace_stop"() : () -> ()
    %20 = vector.extract_strided_slice %14 {offsets = [0, 4], sizes = [8, 4], strides = [1, 1]} : vector<8x16xf32> to vector<8x4xf32>
    %21 = vector.extract_strided_slice %15 {offsets = [0, 4], sizes = [8, 4], strides = [1, 1]} : vector<8x16xf32> to vector<8x4xf32>
    "tpu.trace_start"() <{level = 10 : i32, message = "qd,kd->qk"}> : () -> ()
    %cst_12 = arith.constant dense<0.000000e+00> : vector<8x8xf32>
    %22 = tpu.matmul %20, %21, %cst_12 {dimension_numbers = #tpu.dot_dimension_numbers<[1], [1], [0], [0], [0, 0, 1, 0], [], []>} : vector<8x4xf32>, vector<8x4xf32>, vector<8x8xf32> -> vector<8x8xf32>
    "tpu.trace_stop"() : () -> ()
    %23 = vector.extract_strided_slice %14 {offsets = [0, 8], sizes = [8, 4], strides = [1, 1]} : vector<8x16xf32> to vector<8x4xf32>
    %24 = vector.extract_strided_slice %15 {offsets = [0, 8], sizes = [8, 4], strides = [1, 1]} : vector<8x16xf32> to vector<8x4xf32>
    "tpu.trace_start"() <{level = 10 : i32, message = "qd,kd->qk"}> : () -> ()
    %cst_13 = arith.constant dense<0.000000e+00> : vector<8x8xf32>
    %25 = tpu.matmul %23, %24, %cst_13 {dimension_numbers = #tpu.dot_dimension_numbers<[1], [1], [0], [0], [0, 0, 1, 0], [], []>} : vector<8x4xf32>, vector<8x4xf32>, vector<8x8xf32> -> vector<8x8xf32>
    "tpu.trace_stop"() : () -> ()
    %26 = vector.extract_strided_slice %14 {offsets = [0, 12], sizes = [8, 4], strides = [1, 1]} : vector<8x16xf32> to vector<8x4xf32>
    %27 = vector.extract_strided_slice %15 {offsets = [0, 12], sizes = [8, 4], strides = [1, 1]} : vector<8x16xf32> to vector<8x4xf32>
    "tpu.trace_start"() <{level = 10 : i32, message = "qd,kd->qk"}> : () -> ()
    %cst_14 = arith.constant dense<0.000000e+00> : vector<8x8xf32>
    %28 = tpu.matmul %26, %27, %cst_14 {dimension_numbers = #tpu.dot_dimension_numbers<[1], [1], [0], [0], [0, 0, 1, 0], [], []>} : vector<8x4xf32>, vector<8x4xf32>, vector<8x8xf32> -> vector<8x8xf32>
    "tpu.trace_stop"() : () -> ()
    %29 = vector.shape_cast %19 : vector<8x8xf32> to vector<1x8x8xf32>
    %30 = vector.shape_cast %22 : vector<8x8xf32> to vector<1x8x8xf32>
    %31 = vector.shape_cast %25 : vector<8x8xf32> to vector<1x8x8xf32>
    %32 = vector.shape_cast %28 : vector<8x8xf32> to vector<1x8x8xf32>
    %33 = tpu.concatenate %29, %30, %31, %32 in 0 : vector<1x8x8xf32>, vector<1x8x8xf32>, vector<1x8x8xf32>, vector<1x8x8xf32> -> vector<4x8x8xf32>
    %c0_15 = arith.constant 0 : index
    %c0_16 = arith.constant 0 : index
    %c0_17 = arith.constant 0 : index
    %34 = vector.load %arg7[%c0_15, %c0_16, %c0_17] : memref<1x1x8xf32, #tpu.memory_space<vmem>>, vector<1x1x8xf32>
    %35 = vector.shape_cast %34 : vector<1x1x8xf32> to vector<1x8xf32>
    %36 = vector.shape_cast %35 : vector<1x8xf32> to vector<1x1x8xf32>
    %37 = vector.broadcast %36 : vector<1x1x8xf32> to vector<4x8x8xf32>
    %38 = arith.addf %33, %37 : vector<4x8x8xf32>
    %cst_18 = arith.constant dense<0xFF800000> : vector<4x8xf32>
    %39 = vector.multi_reduction <maximumf>, %38, %cst_18 [2] : vector<4x8x8xf32> to vector<4x8xf32>
    %40 = vector.shape_cast %39 : vector<4x8xf32> to vector<4x8x1xf32>
    %41 = vector.broadcast %40 : vector<4x8x1xf32> to vector<4x8x8xf32>
    %42 = arith.subf %38, %41 : vector<4x8x8xf32>
    %43 = math.exp %42 : vector<4x8x8xf32>
    %cst_19 = arith.constant dense<0.000000e+00> : vector<4x8xf32>
    %44 = vector.multi_reduction <add>, %43, %cst_19 [2] : vector<4x8x8xf32> to vector<4x8xf32>
    %45 = vector.shape_cast %44 : vector<4x8xf32> to vector<4x8x1xf32>
    %46 = tpu.reciprocal %45 {approx = true} : vector<4x8x1xf32> -> vector<4x8x1xf32>
    %47 = arith.mulf %45, %46 : vector<4x8x1xf32>
    %cst_20 = arith.constant 2.000000e+00 : f32
    %48 = vector.broadcast %cst_20 : f32 to vector<4x8x1xf32>
    %49 = arith.subf %48, %47 : vector<4x8x1xf32>
    %50 = arith.mulf %46, %49 : vector<4x8x1xf32>
    %51 = vector.broadcast %50 : vector<4x8x1xf32> to vector<4x8x8xf32>
    %52 = arith.mulf %43, %51 : vector<4x8x8xf32>
    %53 = vector.extract_strided_slice %52 {offsets = [0, 0, 0], sizes = [1, 8, 8], strides = [1, 1, 1]} : vector<4x8x8xf32> to vector<1x8x8xf32>
    %54 = vector.shape_cast %53 : vector<1x8x8xf32> to vector<8x8xf32>
    %55 = vector.extract_strided_slice %16 {offsets = [0, 0], sizes = [8, 4], strides = [1, 1]} : vector<8x16xf32> to vector<8x4xf32>
    %cst_21 = arith.constant dense<0.000000e+00> : vector<8x4xf32>
    %56 = tpu.matmul %54, %55, %cst_21 {dimension_numbers = #tpu.dot_dimension_numbers<[1], [0], [0], [1], [0, 0, 1, 1], [], []>} : vector<8x8xf32>, vector<8x4xf32>, vector<8x4xf32> -> vector<8x4xf32>
    %57 = vector.extract_strided_slice %52 {offsets = [1, 0, 0], sizes = [1, 8, 8], strides = [1, 1, 1]} : vector<4x8x8xf32> to vector<1x8x8xf32>
    %58 = vector.shape_cast %57 : vector<1x8x8xf32> to vector<8x8xf32>
    %59 = vector.extract_strided_slice %16 {offsets = [0, 4], sizes = [8, 4], strides = [1, 1]} : vector<8x16xf32> to vector<8x4xf32>
    %cst_22 = arith.constant dense<0.000000e+00> : vector<8x4xf32>
    %60 = tpu.matmul %58, %59, %cst_22 {dimension_numbers = #tpu.dot_dimension_numbers<[1], [0], [0], [1], [0, 0, 1, 1], [], []>} : vector<8x8xf32>, vector<8x4xf32>, vector<8x4xf32> -> vector<8x4xf32>
    %61 = vector.extract_strided_slice %52 {offsets = [2, 0, 0], sizes = [1, 8, 8], strides = [1, 1, 1]} : vector<4x8x8xf32> to vector<1x8x8xf32>
    %62 = vector.shape_cast %61 : vector<1x8x8xf32> to vector<8x8xf32>
    %63 = vector.extract_strided_slice %16 {offsets = [0, 8], sizes = [8, 4], strides = [1, 1]} : vector<8x16xf32> to vector<8x4xf32>
    %cst_23 = arith.constant dense<0.000000e+00> : vector<8x4xf32>
    %64 = tpu.matmul %62, %63, %cst_23 {dimension_numbers = #tpu.dot_dimension_numbers<[1], [0], [0], [1], [0, 0, 1, 1], [], []>} : vector<8x8xf32>, vector<8x4xf32>, vector<8x4xf32> -> vector<8x4xf32>
    %65 = vector.extract_strided_slice %52 {offsets = [3, 0, 0], sizes = [1, 8, 8], strides = [1, 1, 1]} : vector<4x8x8xf32> to vector<1x8x8xf32>
    %66 = vector.shape_cast %65 : vector<1x8x8xf32> to vector<8x8xf32>
    %67 = vector.extract_strided_slice %16 {offsets = [0, 12], sizes = [8, 4], strides = [1, 1]} : vector<8x16xf32> to vector<8x4xf32>
    %cst_24 = arith.constant dense<0.000000e+00> : vector<8x4xf32>
    %68 = tpu.matmul %66, %67, %cst_24 {dimension_numbers = #tpu.dot_dimension_numbers<[1], [0], [0], [1], [0, 0, 1, 1], [], []>} : vector<8x8xf32>, vector<8x4xf32>, vector<8x4xf32> -> vector<8x4xf32>
    %69 = tpu.concatenate %56, %60, %64, %68 in 1 : vector<8x4xf32>, vector<8x4xf32>, vector<8x4xf32>, vector<8x4xf32> -> vector<8x16xf32>
    %c0_25 = arith.constant 0 : index
    %c0_26 = arith.constant 0 : index
    %c0_27 = arith.constant 0 : index
    %70 = vector.load %arg8[%c0_25, %c0_26, %c0_27] : memref<1x8x16xf32, #tpu.memory_space<vmem>>, vector<1x8x16xf32>
    %71 = vector.shape_cast %70 : vector<1x8x16xf32> to vector<8x16xf32>
    %72 = vector.shape_cast %69 : vector<8x16xf32> to vector<1x8x16xf32>
    tpu.vector_store %arg8[%c0_25, %c0_26, %c0_27], %72 {strides = array<i32>} : memref<1x8x16xf32, #tpu.memory_space<vmem>>, vector<1x8x16xf32>,
    %c0_28 = arith.constant 0 : index
    %c0_29 = arith.constant 0 : index
    %c0_30 = arith.constant 0 : index
    %c0_31 = arith.constant 0 : index
    %73 = vector.load %arg9[%c0_28, %c0_29, %c0_30, %c0_31] : memref<1x4x8x8xf32, #tpu.memory_space<vmem>>, vector<1x4x8x8xf32>
    %74 = vector.shape_cast %73 : vector<1x4x8x8xf32> to vector<4x8x8xf32>
    %75 = vector.shape_cast %38 : vector<4x8x8xf32> to vector<1x4x8x8xf32>
    tpu.vector_store %arg9[%c0_28, %c0_29, %c0_30, %c0_31], %75 {strides = array<i32>} : memref<1x4x8x8xf32, #tpu.memory_space<vmem>>, vector<1x4x8x8xf32>,
    return
  }
  func.func @transform_0(%arg0: i32, %arg1: i32) -> (i32, i32, i32) {
    %c0_i32 = arith.constant 0 : i32
    %c0_i32_0 = arith.constant 0 : i32
    %c0_i32_1 = arith.constant 0 : i32
    return %arg0, %c0_i32, %c0_i32_0 : i32, i32, i32
  }
  func.func @transform_1(%arg0: i32, %arg1: i32) -> (i32, i32) {
    %c0_i32 = arith.constant 0 : i32
    %c0_i32_0 = arith.constant 0 : i32
    %c0_i32_1 = arith.constant 0 : i32
    return %c0_i32, %c0_i32_0 : i32, i32
  }
  func.func @transform_2(%arg0: i32, %arg1: i32) -> (i32, i32) {
    %c0_i32 = arith.constant 0 : i32
    %c0_i32_0 = arith.constant 0 : i32
    %c0_i32_1 = arith.constant 0 : i32
    return %c0_i32, %c0_i32_0 : i32, i32
  }
  func.func @transform_3(%arg0: i32, %arg1: i32) -> (i32, i32) {
    %c0_i32 = arith.constant 0 : i32
    %c0_i32_0 = arith.constant 0 : i32
    %c0_i32_1 = arith.constant 0 : i32
    return %c0_i32, %c0_i32_0 : i32, i32
  }
  func.func @transform_4(%arg0: i32, %arg1: i32) -> (i32, i32) {
    %c0_i32 = arith.constant 0 : i32
    %c0_i32_0 = arith.constant 0 : i32
    %c0_i32_1 = arith.constant 0 : i32
    return %c0_i32, %c0_i32_0 : i32, i32
  }
  func.func @transform_5(%arg0: i32, %arg1: i32) -> (i32, i32, i32) {
    %c0_i32 = arith.constant 0 : i32
    %c0_i32_0 = arith.constant 0 : i32
    %c0_i32_1 = arith.constant 0 : i32
    return %arg0, %c0_i32, %c0_i32_0 : i32, i32, i32
  }
  func.func @transform_6(%arg0: i32, %arg1: i32) -> (i32, i32, i32) {
    %c0_i32 = arith.constant 0 : i32
    %c0_i32_0 = arith.constant 0 : i32
    return %arg0, %arg1, %c0_i32 : i32, i32, i32
  }
  func.func @transform_7(%arg0: i32, %arg1: i32) -> (i32, i32, i32, i32) {
    %c0_i32 = arith.constant 0 : i32
    %c0_i32_0 = arith.constant 0 : i32
    %c0_i32_1 = arith.constant 0 : i32
    return %arg0, %c0_i32, %arg1, %c0_i32_0 : i32, i32, i32, i32
  }
}

</mosaic_0001>

<llo_original>
// kernel: tpu_custom_call.1
$region0: #{tpu_custom_call.1}
  #allocation0 [shape = 'u32[]', space=smem, size = 0x4, offset = 0x4, fixed_abs, tag = 'smem constant byte address 0x4 - core index']
  #allocation1 [shape = 'u32[144,128]{1,0:T(1,128)}', space=vmem, size = 0x12000, scoped, tag = 'internal scratch']
  #allocation2 [shape = 'f32[8,16]{1,0:T(8,128)}', space=vmem, size = 0x1000, scoped, tag = 'scratch operand']
  #allocation3 [shape = 'f32[8,16]{1,0:T(8,128)}', space=vmem, size = 0x1000, scoped, tag = 'scratch operand']
  %s0 = inlined_call_operand.vmem [shape: f32[2,8,32], index: 0, kind: input, shape index: {}]
  %s1 = inlined_call_operand.vmem [shape: f32[32,16], index: 1, kind: input, shape index: {}]
  %s2 = inlined_call_operand.vmem [shape: f32[1,16], index: 2, kind: input, shape index: {}]
  %s3 = inlined_call_operand.vmem [shape: f32[32,32], index: 3, kind: input, shape index: {}]
  %s4 = inlined_call_operand.vmem [shape: f32[1,32], index: 4, kind: input, shape index: {}]
  %s5 = inlined_call_operand.vmem [shape: f32[2,1,8], index: 5, kind: input, shape index: {}]
  %s6 = inlined_call_operand.hbm [shape: f32[2,8,16], index: 6, kind: output, shape index: {0}]
  %s7 = inlined_call_operand.hbm [shape: f32[2,4,8,8], index: 7, kind: output, shape index: {1}]
  %8 = xla_tuple %s6, %s7
  %s9 = sld [smem:[#allocation0]]
  $region69: #{tpu_custom_call.1} parent=0
    _
  %s11 = ssub.s32 1, %s9
  %s12 = scalar_select 0, %s11, %s9
  $region1: #{tpu_custom_call.1} parent=0
    #allocation4 [shape = 'u8[8192]{0}', space=vmem, size = 0x2000, scoped, tag = 'output window, operand 0']
    #allocation5 [shape = 's32[2]{0}', space=sflag, size = 0x8, scoped, tag = 'scoped memory for tpu_custom_call.1']
    #allocation6 [shape = 'u8[32768]{0}', space=vmem, size = 0x8000, scoped, tag = 'output window, operand 1']
    #allocation7 [shape = 's32[2]{0}', space=sflag, size = 0x8, scoped, tag = 'scoped memory for tpu_custom_call.1']
    %13 = vsyncpa [#allocation5], 0
    %s14 = scalar_lea.sflag [#allocation5], 1
    %15 = vsyncpa %s14, 0
    %16 = vsyncpa [#allocation7], 0
    %s17 = scalar_lea.sflag [#allocation7], 1
    %18 = vsyncpa %s17, 0
    loop: start=0, step=1, limit=4
    $region2: #{tpu_custom_call.1} parent=1 // loop_pre_header
      _
    $region3: #{tpu_custom_call.1} parent=1 // loop_header
      %s20 = sphi 0, %s24
      %p21 = scmp.ge.s32.totalorder %s20, 4
      %s27 = sphi 0, %s39
      %s28 = sphi 0, %s35
      %s29 = sphi 0, %s27
      %s30 = sphi 0, %s28
      %s31 = sphi 0, %s29
      %s32 = sphi 0, %s30
      %s42 = sphi 0, %s44
      %s45 = sphi 0, %s42
      %s46 = sphi 0, %s45
      %s62 = sphi 0, %s46
      %s66 = sphi 0, %s66
      %s68 = sphi 0, %s66
      %s69 = sphi 0, %s68
      %s83 = sphi 0, %s69
      %s87 = sphi 0, %s87
      %s89 = sphi 0, %s87
      %s90 = sphi 0, %s89
      %s104 = sphi 0, %s90
      %s108 = sphi 0, %s108
      %s110 = sphi 0, %s108
      %s111 = sphi 0, %s110
      %s125 = sphi 0, %s111
      %s129 = sphi 0, %s129
      %s131 = sphi 0, %s129
      %s132 = sphi 0, %s131
      %s146 = sphi 0, %s132
      %s152 = sphi 0, %s154
      %s155 = sphi 0, %s152
      %s156 = sphi 0, %s155
      %s172 = sphi 0, %s156
      %s180 = sphi 0, %s182
      %s183 = sphi 0, %s180
      %s184 = sphi 0, %s183
      %s200 = sphi 0, %s184
      %s208 = sphi 0, %s210
      %s211 = sphi 0, %s208
      %s212 = sphi 0, %s211
      %s228 = sphi 0, %s212
    $region4: #{tpu_custom_call.1} parent=1 // loop_header_branch
      %23 = sbr.rel (%p21) target = $region8
    $region5: #{tpu_custom_call.1} parent=1 // loop_body
      %s25 = ssub.s32 %s20, 1
      %s26 = ssub.s32 %s20, 2
      %s33 = sadd.s32 1, %s28
      %p34 = scmp.ge.s32.totalorder %s33, 1
      %s35 = scalar_select %p34, 0, %s33
      %s36 = sadd.s32 1, %s27
      %s37 = scalar_select %p34, %s36, %s27
      %p38 = scmp.ge.s32.totalorder %s37, 2
      %s39 = scalar_select %p38, 0, %s37
      %s40 = ssub.s32 %s27, %s39
      %p41 = scmp.eq.s32.totalorder %s40, 0
      %s43 = sadd.s32 %s42, 1
      %s44 = scalar_select %p41, %s42, %s43
      %p47 = pneg %p41
      %p48 = scmp.eq.s32.totalorder %s20, 1
      %p49 = por %p47, %p48
      %p50 = scmp.ne.s32.totalorder %s42, %s45
      %p51 = scmp.eq.s32.totalorder %s20, 0
      %p52 = por %p50, %p51
      %p53 = scmp.ne.s32.totalorder %s42, %s45
      %p54 = scmp.eq.s32.totalorder %s25, 1
      %p55 = por %p53, %p54
      %p56 = scmp.ne.s32.totalorder %s45, %s46
      %p57 = scmp.eq.s32.totalorder %s25, 0
      %p58 = por %p56, %p57
      %p59 = scmp.ne.s32.totalorder %s45, %s46
      %p60 = scmp.eq.s32.totalorder %s26, 1
      %p61 = por %p59, %p60
      %p63 = scmp.ne.s32.totalorder %s46, %s62
      %p64 = scmp.eq.s32.totalorder %s26, 0
      %p65 = por %p63, %p64
      %s67 = sadd.s32 %s66, 1
      %p70 = scmp.eq.s32.totalorder %s20, 1
      %p71 = scmp.ne.s32.totalorder %s66, %s68
      %p72 = scmp.eq.s32.totalorder %s20, 0
      %p73 = por %p71, %p72
      %p74 = scmp.ne.s32.totalorder %s66, %s68
      %p75 = scmp.eq.s32.totalorder %s25, 1
      %p76 = por %p74, %p75
      %p77 = scmp.ne.s32.totalorder %s68, %s69
      %p78 = scmp.eq.s32.totalorder %s25, 0
      %p79 = por %p77, %p78
      %p80 = scmp.ne.s32.totalorder %s68, %s69
      %p81 = scmp.eq.s32.totalorder %s26, 1
      %p82 = por %p80, %p81
      %p84 = scmp.ne.s32.totalorder %s69, %s83
      %p85 = scmp.eq.s32.totalorder %s26, 0
      %p86 = por %p84, %p85
      %s88 = sadd.s32 %s87, 1
      %p91 = scmp.eq.s32.totalorder %s20, 1
      %p92 = scmp.ne.s32.totalorder %s87, %s89
      %p93 = scmp.eq.s32.totalorder %s20, 0
      %p94 = por %p92, %p93
      %p95 = scmp.ne.s32.totalorder %s87, %s89
      %p96 = scmp.eq.s32.totalorder %s25, 1
      %p97 = por %p95, %p96
      %p98 = scmp.ne.s32.totalorder %s89, %s90
      %p99 = scmp.eq.s32.totalorder %s25, 0
      %p100 = por %p98, %p99
      %p101 = scmp.ne.s32.totalorder %s89, %s90
      %p102 = scmp.eq.s32.totalorder %s26, 1
      %p103 = por %p101, %p102
      %p105 = scmp.ne.s32.totalorder %s90, %s104
      %p106 = scmp.eq.s32.totalorder %s26, 0
      %p107 = por %p105, %p106
      %s109 = sadd.s32 %s108, 1
      %p112 = scmp.eq.s32.totalorder %s20, 1
      %p113 = scmp.ne.s32.totalorder %s108, %s110
      %p114 = scmp.eq.s32.totalorder %s20, 0
      %p115 = por %p113, %p114
      %p116 = scmp.ne.s32.totalorder %s108, %s110
      %p117 = scmp.eq.s32.totalorder %s25, 1
      %p118 = por %p116, %p117
      %p119 = scmp.ne.s32.totalorder %s110, %s111
      %p120 = scmp.eq.s32.totalorder %s25, 0
      %p121 = por %p119, %p120
      %p122 = scmp.ne.s32.totalorder %s110, %s111
      %p123 = scmp.eq.s32.totalorder %s26, 1
      %p124 = por %p122, %p123
      %p126 = scmp.ne.s32.totalorder %s111, %s125
      %p127 = scmp.eq.s32.totalorder %s26, 0
      %p128 = por %p126, %p127
      %s130 = sadd.s32 %s129, 1
      %p133 = scmp.eq.s32.totalorder %s20, 1
      %p134 = scmp.ne.s32.totalorder %s129, %s131
      %p135 = scmp.eq.s32.totalorder %s20, 0
      %p136 = por %p134, %p135
      %p137 = scmp.ne.s32.totalorder %s129, %s131
      %p138 = scmp.eq.s32.totalorder %s25, 1
      %p139 = por %p137, %p138
      %p140 = scmp.ne.s32.totalorder %s131, %s132
      %p141 = scmp.eq.s32.totalorder %s25, 0
      %p142 = por %p140, %p141
      %p143 = scmp.ne.s32.totalorder %s131, %s132
      %p144 = scmp.eq.s32.totalorder %s26, 1
      %p145 = por %p143, %p144
      %p147 = scmp.ne.s32.totalorder %s132, %s146
      %p148 = scmp.eq.s32.totalorder %s26, 0
      %p149 = por %p147, %p148
      %s150 = ssub.s32 %s27, %s39
      %p151 = scmp.eq.s32.totalorder %s150, 0
      %s153 = sadd.s32 %s152, 1
      %s154 = scalar_select %p151, %s152, %s153
      %p157 = pneg %p151
      %p158 = scmp.eq.s32.totalorder %s20, 1
      %p159 = por %p157, %p158
      %p160 = scmp.ne.s32.totalorder %s152, %s155
      %p161 = scmp.eq.s32.totalorder %s20, 0
      %p162 = por %p160, %p161
      %p163 = scmp.ne.s32.totalorder %s152, %s155
      %p164 = scmp.eq.s32.totalorder %s25, 1
      %p165 = por %p163, %p164
      %p166 = scmp.ne.s32.totalorder %s155, %s156
      %p167 = scmp.eq.s32.totalorder %s25, 0
      %p168 = por %p166, %p167
      %p169 = scmp.ne.s32.totalorder %s155, %s156
      %p170 = scmp.eq.s32.totalorder %s26, 1
      %p171 = por %p169, %p170
      %p173 = scmp.ne.s32.totalorder %s156, %s172
      %p174 = scmp.eq.s32.totalorder %s26, 0
      %p175 = por %p173, %p174
      %s176 = ssub.s32 %s27, %s39
      %s177 = ssub.s32 %s28, %s35
      %s178 = sor.u32 %s176, %s177
      %p179 = scmp.eq.s32.totalorder %s178, 0
      %s181 = sadd.s32 %s180, 1
      %s182 = scalar_select %p179, %s180, %s181
      %p185 = pneg %p179
      %p186 = scmp.eq.s32.totalorder %s20, 1
      %p187 = por %p185, %p186
      %p188 = scmp.ne.s32.totalorder %s180, %s183
      %p189 = scmp.eq.s32.totalorder %s20, 0
      %p190 = por %p188, %p189
      %p191 = scmp.ne.s32.totalorder %s180, %s183
      %p192 = scmp.eq.s32.totalorder %s25, 1
      %p193 = por %p191, %p192
      %p194 = scmp.ne.s32.totalorder %s183, %s184
      %p195 = scmp.eq.s32.totalorder %s25, 0
      %p196 = por %p194, %p195
      %p197 = scmp.ne.s32.totalorder %s183, %s184
      %p198 = scmp.eq.s32.totalorder %s26, 1
      %p199 = por %p197, %p198
      %p201 = scmp.ne.s32.totalorder %s184, %s200
      %p202 = scmp.eq.s32.totalorder %s26, 0
      %p203 = por %p201, %p202
      %s204 = ssub.s32 %s27, %s39
      %s205 = ssub.s32 %s28, %s35
      %s206 = sor.u32 %s204, %s205
      %p207 = scmp.eq.s32.totalorder %s206, 0
      %s209 = sadd.s32 %s208, 1
      %s210 = scalar_select %p207, %s208, %s209
      %p213 = pneg %p207
      %p214 = scmp.eq.s32.totalorder %s20, 1
      %p215 = por %p213, %p214
      %p216 = scmp.ne.s32.totalorder %s208, %s211
      %p217 = scmp.eq.s32.totalorder %s20, 0
      %p218 = por %p216, %p217
      %p219 = scmp.ne.s32.totalorder %s208, %s211
      %p220 = scmp.eq.s32.totalorder %s25, 1
      %p221 = por %p219, %p220
      %p222 = scmp.ne.s32.totalorder %s211, %s212
      %p223 = scmp.eq.s32.totalorder %s25, 0
      %p224 = por %p222, %p223
      %p225 = scmp.ne.s32.totalorder %s211, %s212
      %p226 = scmp.eq.s32.totalorder %s26, 1
      %p227 = por %p225, %p226
      %p229 = scmp.ne.s32.totalorder %s212, %s228
      %p230 = scmp.eq.s32.totalorder %s26, 0
      %p231 = por %p229, %p230
      %p232 = scmp.le.s32.totalorder 1, %s20
      %p233 = scmp.lt.s32.totalorder %s20, 3
      %p234 = pnand %p232, %p233
      %p235 = pneg %p234
      // Predicated region
      $region9: #{tpu_custom_call.1} parent=5 // pred_check
        _
      $region10: #{tpu_custom_call.1} parent=5 // pred_check_branch
        %237 = sbr.rel (%p234) target = $region12
      $region11: #{tpu_custom_call.1} parent=5 // pred_region
        %s238 = ssub.s32 %s20, 1
        // Predicated region
        $region13: #{tpu_custom_call.1} parent=11 // pred_check
          %p239 = pneg %p79
        $region14: #{tpu_custom_call.1} parent=11 // pred_check_branch
          %241 = sbr.rel (%p239) target = $region16
        $region15: #{tpu_custom_call.1} parent=11 // pred_region
          _
        $region16: #{tpu_custom_call.1} parent=11 // pred_fallthru
          _
        // Predicated region
        $region17: #{tpu_custom_call.1} parent=11 // pred_check
          %p242 = pneg %p100
        $region18: #{tpu_custom_call.1} parent=11 // pred_check_branch
          %244 = sbr.rel (%p242) target = $region20
        $region19: #{tpu_custom_call.1} parent=11 // pred_region
          _
        $region20: #{tpu_custom_call.1} parent=11 // pred_fallthru
          _
        // Predicated region
        $region21: #{tpu_custom_call.1} parent=11 // pred_check
          %p245 = pneg %p121
        $region22: #{tpu_custom_call.1} parent=11 // pred_check_branch
          %247 = sbr.rel (%p245) target = $region24
        $region23: #{tpu_custom_call.1} parent=11 // pred_region
          _
        $region24: #{tpu_custom_call.1} parent=11 // pred_fallthru
          _
        // Predicated region
        $region25: #{tpu_custom_call.1} parent=11 // pred_check
          %p248 = pneg %p142
        $region26: #{tpu_custom_call.1} parent=11 // pred_check_branch
          %250 = sbr.rel (%p248) target = $region28
        $region27: #{tpu_custom_call.1} parent=11 // pred_region
          _
        $region28: #{tpu_custom_call.1} parent=11 // pred_fallthru
          _
      $region12: #{tpu_custom_call.1} parent=5 // pred_fallthru
        _
      %p251 = scmp.lt.s32.totalorder %s20, 2
      // Predicated region
      $region29: #{tpu_custom_call.1} parent=5 // pred_check
        %p252 = pneg %p251
      $region30: #{tpu_custom_call.1} parent=5 // pred_check_branch
        %254 = sbr.rel (%p252) target = $region32
      $region31: #{tpu_custom_call.1} parent=5 // pred_region
        // Predicated region
        $region33: #{tpu_custom_call.1} parent=31 // pred_check
          %p255 = pneg %p52
        $region34: #{tpu_custom_call.1} parent=31 // pred_check_branch
          %257 = sbr.rel (%p255) target = $region36
        $region35: #{tpu_custom_call.1} parent=31 // pred_region
          %p258 = scmp.lt.s32.totalorder %s27, 1
          %s259 = scalar_select %p258, %s27, 1
          %s260 = smul.addr %s259, 8
          %s261 = scalar_lea.vmem %s0, %s260
        $region36: #{tpu_custom_call.1} parent=31 // pred_fallthru
          _
        // Predicated region
        $region37: #{tpu_custom_call.1} parent=31 // pred_check
          %p262 = pneg %p162
        $region38: #{tpu_custom_call.1} parent=31 // pred_check_branch
          %264 = sbr.rel (%p262) target = $region40
        $region39: #{tpu_custom_call.1} parent=31 // pred_region
          %p265 = scmp.lt.s32.totalorder %s27, 1
          %s266 = scalar_select %p265, %s27, 1
          %s267 = scalar_lea.vmem %s5, %s266
        $region40: #{tpu_custom_call.1} parent=31 // pred_fallthru
          _
      $region32: #{tpu_custom_call.1} parent=5 // pred_fallthru
        _
      %p268 = scmp.le.s32.totalorder 1, %s20
      %p269 = scmp.lt.s32.totalorder %s20, 3
      %p270 = pnand %p268, %p269
      %p271 = pneg %p270
      // Predicated region
      $region41: #{tpu_custom_call.1} parent=5 // pred_check
        _
      $region42: #{tpu_custom_call.1} parent=5 // pred_check_branch
        %273 = sbr.rel (%p270) target = $region44
      $region43: #{tpu_custom_call.1} parent=5 // pred_region
        %s274 = ssub.s32 %s20, 1
        %p275 = scmp.lt.s32.totalorder %s29, 1
        %s276 = scalar_select %p275, %s29, 1
        %s277 = smul.addr %s276, 8
        %s278 = scalar_lea.vmem %s0, %s277
        %p279 = pneg %p58
        %p280 = pneg %p55
        %p281 = pneg %p79
        %p282 = pneg %p76
        %p283 = pneg %p100
        %p284 = pneg %p97
        %p285 = pneg %p121
        %p286 = pneg %p118
        %p287 = pneg %p142
        %p288 = pneg %p139
        %p289 = scmp.lt.s32.totalorder %s29, 1
        %s290 = scalar_select %p289, %s29, 1
        %s291 = scalar_lea.vmem %s5, %s290
        %p292 = pneg %p168
        %p293 = pneg %p165
        %p294 = pneg %p196
        %p295 = pneg %p193
        %s296 = sand.u32 %s183, 1
        %s297 = scalar_lea.sflag [#allocation5], %s296
        %s298 = sand.u32 %s183, 1
        %s299 = smul.addr %s298, 8
        %s300 = scalar_lea.vmem [#allocation4], %s299
        %p301 = pneg %p224
        %p302 = pneg %p221
        %s303 = sand.u32 %s211, 1
        %s304 = scalar_lea.sflag [#allocation7], %s303
        %s305 = sand.u32 %s211, 1
        %s306 = smul.addr %s305, 32
        %s307 = scalar_lea.vmem [#allocation6], %s306
        %p308 = scmp.lt.s32.totalorder %s29, 1
        %s309 = scalar_select %p308, %s29, 1
        %s310 = smul.addr %s309, 8
        %s311 = scalar_lea.vmem %s0, %s310
        %p312 = scmp.lt.s32.totalorder %s29, 1
        %s313 = scalar_select %p312, %s29, 1
        %s314 = scalar_lea.vmem %s5, %s313
        %p315 = scmp.eq.s32.totalorder %s30, 0
        // Predicated region
        $region45: #{tpu_custom_call.1} parent=43 // pred_check
          %p316 = pneg %p315
        $region46: #{tpu_custom_call.1} parent=43 // pred_check_branch
          %318 = sbr.rel (%p316) target = $region48
        $region47: #{tpu_custom_call.1} parent=43 // pred_region
          %v319 = vld [vmem:[%s311] sm:$0xff]
          %v320 = vld [vmem:[%s3] sm:$0xff]
          %v321 = vld [vmem:[%s3 + $0x8] sm:$0xff]
          %v322 = vld [vmem:[%s3 + $0x10] sm:$0xff]
          %v323 = vld [vmem:[%s3 + $0x18] sm:$0xff]
          %v324 = vld [vmem:[%s4] sm:$0x1]
          %v326 = vlaneseq
          %v327 = vshrl.u32 %v326, 7
          %v328 = vsub.s32 0, %v327
          %v329 = vrot.slane %v324, %v328
          %vm331 = vcmask 261120
          %v333 = vsel %vm331, %v319, 0
          %335 = vmatprep.subr.mxu0 0.0
          %336 = vmatpush1.msra.mxu0 0.0
          %337 = vmatprep.subr.mxu0 0.0
          %338 = vmatpush1.msra.mxu0 0.0
          %339 = vmatprep.subr.mxu0 0.0
          %340 = vmatpush1.msra.mxu0 0.0
          %341 = vmatprep.subr.mxu0 0.0
          %342 = vmatpush1.msra.mxu0 0.0
          %343 = vmatprep.subr.mxu0 0.0
          %344 = vmatpush1.msra.mxu0 0.0
          %345 = vmatprep.subr.mxu0 0.0
          %346 = vmatpush1.msra.mxu0 0.0
          %347 = vmatprep.subr.mxu0 0.0
          %348 = vmatpush1.msra.mxu0 0.0
          %349 = vmatprep.subr.mxu0 0.0
          %350 = vmatpush1.msra.mxu0 0.0
          %351 = vmatprep.subr.mxu0 0.0
          %352 = vmatpush1.msra.mxu0 0.0
          %353 = vmatprep.subr.mxu0 0.0
          %354 = vmatpush1.msra.mxu0 0.0
          %355 = vmatprep.subr.mxu0 0.0
          %356 = vmatpush1.msra.mxu0 0.0
          %357 = vmatprep.subr.mxu0 0.0
          %358 = vmatpush1.msra.mxu0 0.0
          %359 = vmatprep.subr.mxu0 0.0
          %360 = vmatpush1.msra.mxu0 %v323
          %361 = vmatprep.subr.mxu0 0.0
          %362 = vmatpush1.msra.mxu0 %v322
          %363 = vmatprep.subr.mxu0 0.0
          %364 = vmatpush1.msra.mxu0 %v321
          %365 = vmatprep.subr.mxu0 0.0
          %366 = vmatpush1.msra.mxu0 %v320
          %367 = vmatprep.subr.mxu0 0.0
          %368 = vmatpush2.msra.mxu0 0.0
          %369 = vmatprep.subr.mxu0 0.0
          %370 = vmatpush2.msra.mxu0 0.0
          %371 = vmatprep.subr.mxu0 0.0
          %372 = vmatpush2.msra.mxu0 0.0
          %373 = vmatprep.subr.mxu0 0.0
          %374 = vmatpush2.msra.mxu0 0.0
          %375 = vmatprep.subr.mxu0 0.0
          %376 = vmatpush2.msra.mxu0 0.0
          %377 = vmatprep.subr.mxu0 0.0
          %378 = vmatpush2.msra.mxu0 0.0
          %379 = vmatprep.subr.mxu0 0.0
          %380 = vmatpush2.msra.mxu0 0.0
          %381 = vmatprep.subr.mxu0 0.0
          %382 = vmatpush2.msra.mxu0 0.0
          %383 = vmatprep.subr.mxu0 0.0
          %384 = vmatpush2.msra.mxu0 0.0
          %385 = vmatprep.subr.mxu0 0.0
          %386 = vmatpush2.msra.mxu0 0.0
          %387 = vmatprep.subr.mxu0 0.0
          %388 = vmatpush2.msra.mxu0 0.0
          %389 = vmatprep.subr.mxu0 0.0
          %390 = vmatpush2.msra.mxu0 0.0
          %391 = vmatprep.subr.mxu0 0.0
          %392 = vmatpush2.msra.mxu0 0.0
          %393 = vmatprep.subr.mxu0 0.0
          %394 = vmatpush2.msra.mxu0 0.0
          %395 = vmatprep.subr.mxu0 0.0
          %396 = vmatpush2.msra.mxu0 0.0
          %397 = vmatprep.subr.mxu0 0.0
          %398 = vmatpush2.msra.mxu0 0.0
          %399 = vmatprep.mubr.f32.mxu0 0.0
          %400 = vmatmul.mubr.f32.gmra.mxu0 %v333
          %v401 = vpop.f32.mrf.mxu0
          %v402 = vadd.f32 %v329, %v401
          %v403 = vpop.f32.mrf.mxu0
          %404 = vdwg.mxu0
          %vm405 = vcmask 130048
          %406 = vst.msk [vmem:[#allocation2] sm:$0xff] %vm405, %v402
          %408 = vrot.lane.b32.xlu0 %v402, 112
          %v409 = vpop.permute.xlu0 %408
          %411 = vst.msk [vmem:[#allocation3] sm:$0xff] %vm405, %v409
        $region48: #{tpu_custom_call.1} parent=43 // pred_fallthru
          _
        %s412 = smul.u32 %s30, 8
        %s413 = scalar_lea.vmem %s311, %s412
        %v414 = vld [vmem:[%s413] sm:$0xff]
        %v415 = vld [vmem:[%s1] sm:$0xff]
        %v416 = vld [vmem:[%s1 + $0x8] sm:$0xff]
        %v417 = vld [vmem:[%s1 + $0x10] sm:$0xff]
        %v418 = vld [vmem:[%s1 + $0x18] sm:$0xff]
        %v419 = vld [vmem:[%s2] sm:$0x1]
        %v421 = vlaneseq
        %v422 = vshrl.u32 %v421, 7
        %v423 = vsub.s32 0, %v422
        %v424 = vrot.slane %v419, %v423
        %vm426 = vcmask 261120
        %v428 = vsel %vm426, %v414, 0
        %430 = vmatprep.subr.mxu0 0.0
        %431 = vmatpush1.msra.mxu0 0.0
        %432 = vmatprep.subr.mxu0 0.0
        %433 = vmatpush1.msra.mxu0 0.0
        %434 = vmatprep.subr.mxu0 0.0
        %435 = vmatpush1.msra.mxu0 0.0
        %436 = vmatprep.subr.mxu0 0.0
        %437 = vmatpush1.msra.mxu0 0.0
        %438 = vmatprep.subr.mxu0 0.0
        %439 = vmatpush1.msra.mxu0 0.0
        %440 = vmatprep.subr.mxu0 0.0
        %441 = vmatpush1.msra.mxu0 0.0
        %442 = vmatprep.subr.mxu0 0.0
        %443 = vmatpush1.msra.mxu0 0.0
        %444 = vmatprep.subr.mxu0 0.0
        %445 = vmatpush1.msra.mxu0 0.0
        %446 = vmatprep.subr.mxu0 0.0
        %447 = vmatpush1.msra.mxu0 0.0
        %448 = vmatprep.subr.mxu0 0.0
        %449 = vmatpush1.msra.mxu0 0.0
        %450 = vmatprep.subr.mxu0 0.0
        %451 = vmatpush1.msra.mxu0 0.0
        %452 = vmatprep.subr.mxu0 0.0
        %453 = vmatpush1.msra.mxu0 0.0
        %454 = vmatprep.subr.mxu0 0.0
        %455 = vmatpush1.msra.mxu0 %v418
        %456 = vmatprep.subr.mxu0 0.0
        %457 = vmatpush1.msra.mxu0 %v417
        %458 = vmatprep.subr.mxu0 0.0
        %459 = vmatpush1.msra.mxu0 %v416
        %460 = vmatprep.subr.mxu0 0.0
        %461 = vmatpush1.msra.mxu0 %v415
        %462 = vmatprep.subr.mxu0 0.0
        %463 = vmatpush2.msra.mxu0 0.0
        %464 = vmatprep.subr.mxu0 0.0
        %465 = vmatpush2.msra.mxu0 0.0
        %466 = vmatprep.subr.mxu0 0.0
        %467 = vmatpush2.msra.mxu0 0.0
        %468 = vmatprep.subr.mxu0 0.0
        %469 = vmatpush2.msra.mxu0 0.0
        %470 = vmatprep.subr.mxu0 0.0
        %471 = vmatpush2.msra.mxu0 0.0
        %472 = vmatprep.subr.mxu0 0.0
        %473 = vmatpush2.msra.mxu0 0.0
        %474 = vmatprep.subr.mxu0 0.0
        %475 = vmatpush2.msra.mxu0 0.0
        %476 = vmatprep.subr.mxu0 0.0
        %477 = vmatpush2.msra.mxu0 0.0
        %478 = vmatprep.subr.mxu0 0.0
        %479 = vmatpush2.msra.mxu0 0.0
        %480 = vmatprep.subr.mxu0 0.0
        %481 = vmatpush2.msra.mxu0 0.0
        %482 = vmatprep.subr.mxu0 0.0
        %483 = vmatpush2.msra.mxu0 0.0
        %484 = vmatprep.subr.mxu0 0.0
        %485 = vmatpush2.msra.mxu0 0.0
        %486 = vmatprep.subr.mxu0 0.0
        %487 = vmatpush2.msra.mxu0 0.0
        %488 = vmatprep.subr.mxu0 0.0
        %489 = vmatpush2.msra.mxu0 0.0
        %490 = vmatprep.subr.mxu0 0.0
        %491 = vmatpush2.msra.mxu0 0.0
        %492 = vmatprep.subr.mxu0 0.0
        %493 = vmatpush2.msra.mxu0 0.0
        %494 = vmatprep.mubr.f32.mxu0 0.0
        %495 = vmatmul.mubr.f32.gmra.mxu0 %v428
        %v496 = vpop.f32.mrf.mxu0
        %v497 = vadd.f32 %v424, %v496
        %v498 = vpop.f32.mrf.mxu0
        %499 = vdwg.mxu0
        %v500 = vmul.f32 %v497, 0.5
        %v501 = vld [vmem:[#allocation2] sm:$0xff]
        %v502 = vld [vmem:[#allocation3] sm:$0xff]
        %vm503 = vcmask 31744
        %v505 = vsel %vm503, %v500, 0
        %v508 = vsel %vm503, %v501, 0
        %510 = vmatprep.subr.mxu0 0.0
        %511 = vmatpush1.xpose.msra.mxu0 0.0
        %512 = vmatprep.subr.mxu0 0.0
        %513 = vmatpush1.xpose.msra.mxu0 0.0
        %514 = vmatprep.subr.mxu0 0.0
        %515 = vmatpush1.xpose.msra.mxu0 0.0
        %516 = vmatprep.subr.mxu0 0.0
        %517 = vmatpush1.xpose.msra.mxu0 0.0
        %518 = vmatprep.subr.mxu0 0.0
        %519 = vmatpush1.xpose.msra.mxu0 0.0
        %520 = vmatprep.subr.mxu0 0.0
        %521 = vmatpush1.xpose.msra.mxu0 0.0
        %522 = vmatprep.subr.mxu0 0.0
        %523 = vmatpush1.xpose.msra.mxu0 0.0
        %524 = vmatprep.subr.mxu0 0.0
        %525 = vmatpush1.xpose.msra.mxu0 0.0
        %526 = vmatprep.subr.mxu0 0.0
        %527 = vmatpush1.xpose.msra.mxu0 0.0
        %528 = vmatprep.subr.mxu0 0.0
        %529 = vmatpush1.xpose.msra.mxu0 0.0
        %530 = vmatprep.subr.mxu0 0.0
        %531 = vmatpush1.xpose.msra.mxu0 0.0
        %532 = vmatprep.subr.mxu0 0.0
        %533 = vmatpush1.xpose.msra.mxu0 0.0
        %534 = vmatprep.subr.mxu0 0.0
        %535 = vmatpush1.xpose.msra.mxu0 0.0
        %536 = vmatprep.subr.mxu0 0.0
        %537 = vmatpush1.xpose.msra.mxu0 0.0
        %538 = vmatprep.subr.mxu0 0.0
        %539 = vmatpush1.xpose.msra.mxu0 0.0
        %540 = vmatprep.subr.mxu0 0.0
        %541 = vmatpush1.xpose.msra.mxu0 %v508
        %542 = vmatprep.subr.mxu0 0.0
        %543 = vmatpush2.xpose.msra.mxu0 0.0
        %544 = vmatprep.subr.mxu0 0.0
        %545 = vmatpush2.xpose.msra.mxu0 0.0
        %546 = vmatprep.subr.mxu0 0.0
        %547 = vmatpush2.xpose.msra.mxu0 0.0
        %548 = vmatprep.subr.mxu0 0.0
        %549 = vmatpush2.xpose.msra.mxu0 0.0
        %550 = vmatprep.subr.mxu0 0.0
        %551 = vmatpush2.xpose.msra.mxu0 0.0
        %552 = vmatprep.subr.mxu0 0.0
        %553 = vmatpush2.xpose.msra.mxu0 0.0
        %554 = vmatprep.subr.mxu0 0.0
        %555 = vmatpush2.xpose.msra.mxu0 0.0
        %556 = vmatprep.subr.mxu0 0.0
        %557 = vmatpush2.xpose.msra.mxu0 0.0
        %558 = vmatprep.subr.mxu0 0.0
        %559 = vmatpush2.xpose.msra.mxu0 0.0
        %560 = vmatprep.subr.mxu0 0.0
        %561 = vmatpush2.xpose.msra.mxu0 0.0
        %562 = vmatprep.subr.mxu0 0.0
        %563 = vmatpush2.xpose.msra.mxu0 0.0
        %564 = vmatprep.subr.mxu0 0.0
        %565 = vmatpush2.xpose.msra.mxu0 0.0
        %566 = vmatprep.subr.mxu0 0.0
        %567 = vmatpush2.xpose.msra.mxu0 0.0
        %568 = vmatprep.subr.mxu0 0.0
        %569 = vmatpush2.xpose.msra.mxu0 0.0
        %570 = vmatprep.subr.mxu0 0.0
        %571 = vmatpush2.xpose.msra.mxu0 0.0
        %572 = vmatprep.subr.mxu0 0.0
        %573 = vmatpush2.xpose.msra.mxu0 0.0
        %574 = vmatprep.mubr.f32.mxu0 0.0
        %575 = vmatmul.mubr.f32.gmra.mxu0 %v505
        %v576 = vpop.f32.mrf.mxu0
        %v577 = vadd.f32 0.0, %v576
        %v578 = vpop.f32.mrf.mxu0
        %579 = vdwg.mxu0
        %580 = vrot.lane.b32.xlu0 %v500, 124
        %v581 = vpop.permute.xlu0 %580
        %582 = vrot.lane.b32.xlu0 %v501, 124
        %v583 = vpop.permute.xlu0 %582
        %v584 = vsel %vm503, %v581, 0
        %v586 = vsel %vm503, %v583, 0
        %588 = vmatprep.subr.mxu0 0.0
        %589 = vmatpush1.xpose.msra.mxu0 0.0
        %590 = vmatprep.subr.mxu0 0.0
        %591 = vmatpush1.xpose.msra.mxu0 0.0
        %592 = vmatprep.subr.mxu0 0.0
        %593 = vmatpush1.xpose.msra.mxu0 0.0
        %594 = vmatprep.subr.mxu0 0.0
        %595 = vmatpush1.xpose.msra.mxu0 0.0
        %596 = vmatprep.subr.mxu0 0.0
        %597 = vmatpush1.xpose.msra.mxu0 0.0
        %598 = vmatprep.subr.mxu0 0.0
        %599 = vmatpush1.xpose.msra.mxu0 0.0
        %600 = vmatprep.subr.mxu0 0.0
        %601 = vmatpush1.xpose.msra.mxu0 0.0
        %602 = vmatprep.subr.mxu0 0.0
        %603 = vmatpush1.xpose.msra.mxu0 0.0
        %604 = vmatprep.subr.mxu0 0.0
        %605 = vmatpush1.xpose.msra.mxu0 0.0
        %606 = vmatprep.subr.mxu0 0.0
        %607 = vmatpush1.xpose.msra.mxu0 0.0
        %608 = vmatprep.subr.mxu0 0.0
        %609 = vmatpush1.xpose.msra.mxu0 0.0
        %610 = vmatprep.subr.mxu0 0.0
        %611 = vmatpush1.xpose.msra.mxu0 0.0
        %612 = vmatprep.subr.mxu0 0.0
        %613 = vmatpush1.xpose.msra.mxu0 0.0
        %614 = vmatprep.subr.mxu0 0.0
        %615 = vmatpush1.xpose.msra.mxu0 0.0
        %616 = vmatprep.subr.mxu0 0.0
        %617 = vmatpush1.xpose.msra.mxu0 0.0
        %618 = vmatprep.subr.mxu0 0.0
        %619 = vmatpush1.xpose.msra.mxu0 %v586
        %620 = vmatprep.subr.mxu0 0.0
        %621 = vmatpush2.xpose.msra.mxu0 0.0
        %622 = vmatprep.subr.mxu0 0.0
        %623 = vmatpush2.xpose.msra.mxu0 0.0
        %624 = vmatprep.subr.mxu0 0.0
        %625 = vmatpush2.xpose.msra.mxu0 0.0
        %626 = vmatprep.subr.mxu0 0.0
        %627 = vmatpush2.xpose.msra.mxu0 0.0
        %628 = vmatprep.subr.mxu0 0.0
        %629 = vmatpush2.xpose.msra.mxu0 0.0
        %630 = vmatprep.subr.mxu0 0.0
        %631 = vmatpush2.xpose.msra.mxu0 0.0
        %632 = vmatprep.subr.mxu0 0.0
        %633 = vmatpush2.xpose.msra.mxu0 0.0
        %634 = vmatprep.subr.mxu0 0.0
        %635 = vmatpush2.xpose.msra.mxu0 0.0
        %636 = vmatprep.subr.mxu0 0.0
        %637 = vmatpush2.xpose.msra.mxu0 0.0
        %638 = vmatprep.subr.mxu0 0.0
        %639 = vmatpush2.xpose.msra.mxu0 0.0
        %640 = vmatprep.subr.mxu0 0.0
        %641 = vmatpush2.xpose.msra.mxu0 0.0
        %642 = vmatprep.subr.mxu0 0.0
        %643 = vmatpush2.xpose.msra.mxu0 0.0
        %644 = vmatprep.subr.mxu0 0.0
        %645 = vmatpush2.xpose.msra.mxu0 0.0
        %646 = vmatprep.subr.mxu0 0.0
        %647 = vmatpush2.xpose.msra.mxu0 0.0
        %648 = vmatprep.subr.mxu0 0.0
        %649 = vmatpush2.xpose.msra.mxu0 0.0
        %650 = vmatprep.subr.mxu0 0.0
        %651 = vmatpush2.xpose.msra.mxu0 0.0
        %652 = vmatprep.mubr.f32.mxu0 0.0
        %653 = vmatmul.mubr.f32.gmra.mxu0 %v584
        %v654 = vpop.f32.mrf.mxu0
        %v655 = vadd.f32 0.0, %v654
        %v656 = vpop.f32.mrf.mxu0
        %657 = vdwg.mxu0
        %658 = vrot.lane.b32.xlu0 %v500, 120
        %v659 = vpop.permute.xlu0 %658
        %660 = vrot.lane.b32.xlu0 %v501, 120
        %v661 = vpop.permute.xlu0 %660
        %v662 = vsel %vm503, %v659, 0
        %v664 = vsel %vm503, %v661, 0
        %666 = vmatprep.subr.mxu0 0.0
        %667 = vmatpush1.xpose.msra.mxu0 0.0
        %668 = vmatprep.subr.mxu0 0.0
        %669 = vmatpush1.xpose.msra.mxu0 0.0
        %670 = vmatprep.subr.mxu0 0.0
        %671 = vmatpush1.xpose.msra.mxu0 0.0
        %672 = vmatprep.subr.mxu0 0.0
        %673 = vmatpush1.xpose.msra.mxu0 0.0
        %674 = vmatprep.subr.mxu0 0.0
        %675 = vmatpush1.xpose.msra.mxu0 0.0
        %676 = vmatprep.subr.mxu0 0.0
        %677 = vmatpush1.xpose.msra.mxu0 0.0
        %678 = vmatprep.subr.mxu0 0.0
        %679 = vmatpush1.xpose.msra.mxu0 0.0
        %680 = vmatprep.subr.mxu0 0.0
        %681 = vmatpush1.xpose.msra.mxu0 0.0
        %682 = vmatprep.subr.mxu0 0.0
        %683 = vmatpush1.xpose.msra.mxu0 0.0
        %684 = vmatprep.subr.mxu0 0.0
        %685 = vmatpush1.xpose.msra.mxu0 0.0
        %686 = vmatprep.subr.mxu0 0.0
        %687 = vmatpush1.xpose.msra.mxu0 0.0
        %688 = vmatprep.subr.mxu0 0.0
        %689 = vmatpush1.xpose.msra.mxu0 0.0
        %690 = vmatprep.subr.mxu0 0.0
        %691 = vmatpush1.xpose.msra.mxu0 0.0
        %692 = vmatprep.subr.mxu0 0.0
        %693 = vmatpush1.xpose.msra.mxu0 0.0
        %694 = vmatprep.subr.mxu0 0.0
        %695 = vmatpush1.xpose.msra.mxu0 0.0
        %696 = vmatprep.subr.mxu0 0.0
        %697 = vmatpush1.xpose.msra.mxu0 %v664
        %698 = vmatprep.subr.mxu0 0.0
        %699 = vmatpush2.xpose.msra.mxu0 0.0
        %700 = vmatprep.subr.mxu0 0.0
        %701 = vmatpush2.xpose.msra.mxu0 0.0
        %702 = vmatprep.subr.mxu0 0.0
        %703 = vmatpush2.xpose.msra.mxu0 0.0
        %704 = vmatprep.subr.mxu0 0.0
        %705 = vmatpush2.xpose.msra.mxu0 0.0
        %706 = vmatprep.subr.mxu0 0.0
        %707 = vmatpush2.xpose.msra.mxu0 0.0
        %708 = vmatprep.subr.mxu0 0.0
        %709 = vmatpush2.xpose.msra.mxu0 0.0
        %710 = vmatprep.subr.mxu0 0.0
        %711 = vmatpush2.xpose.msra.mxu0 0.0
        %712 = vmatprep.subr.mxu0 0.0
        %713 = vmatpush2.xpose.msra.mxu0 0.0
        %714 = vmatprep.subr.mxu0 0.0
        %715 = vmatpush2.xpose.msra.mxu0 0.0
        %716 = vmatprep.subr.mxu0 0.0
        %717 = vmatpush2.xpose.msra.mxu0 0.0
        %718 = vmatprep.subr.mxu0 0.0
        %719 = vmatpush2.xpose.msra.mxu0 0.0
        %720 = vmatprep.subr.mxu0 0.0
        %721 = vmatpush2.xpose.msra.mxu0 0.0
        %722 = vmatprep.subr.mxu0 0.0
        %723 = vmatpush2.xpose.msra.mxu0 0.0
        %724 = vmatprep.subr.mxu0 0.0
        %725 = vmatpush2.xpose.msra.mxu0 0.0
        %726 = vmatprep.subr.mxu0 0.0
        %727 = vmatpush2.xpose.msra.mxu0 0.0
        %728 = vmatprep.subr.mxu0 0.0
        %729 = vmatpush2.xpose.msra.mxu0 0.0
        %730 = vmatprep.mubr.f32.mxu0 0.0
        %731 = vmatmul.mubr.f32.gmra.mxu0 %v662
        %v732 = vpop.f32.mrf.mxu0
        %v733 = vadd.f32 0.0, %v732
        %v734 = vpop.f32.mrf.mxu0
        %735 = vdwg.mxu0
        %736 = vrot.lane.b32.xlu0 %v500, 116
        %v737 = vpop.permute.xlu0 %736
        %738 = vrot.lane.b32.xlu0 %v501, 116
        %v739 = vpop.permute.xlu0 %738
        %v740 = vsel %vm503, %v737, 0
        %v742 = vsel %vm503, %v739, 0
        %744 = vmatprep.subr.mxu0 0.0
        %745 = vmatpush1.xpose.msra.mxu0 0.0
        %746 = vmatprep.subr.mxu0 0.0
        %747 = vmatpush1.xpose.msra.mxu0 0.0
        %748 = vmatprep.subr.mxu0 0.0
        %749 = vmatpush1.xpose.msra.mxu0 0.0
        %750 = vmatprep.subr.mxu0 0.0
        %751 = vmatpush1.xpose.msra.mxu0 0.0
        %752 = vmatprep.subr.mxu0 0.0
        %753 = vmatpush1.xpose.msra.mxu0 0.0
        %754 = vmatprep.subr.mxu0 0.0
        %755 = vmatpush1.xpose.msra.mxu0 0.0
        %756 = vmatprep.subr.mxu0 0.0
        %757 = vmatpush1.xpose.msra.mxu0 0.0
        %758 = vmatprep.subr.mxu0 0.0
        %759 = vmatpush1.xpose.msra.mxu0 0.0
        %760 = vmatprep.subr.mxu0 0.0
        %761 = vmatpush1.xpose.msra.mxu0 0.0
        %762 = vmatprep.subr.mxu0 0.0
        %763 = vmatpush1.xpose.msra.mxu0 0.0
        %764 = vmatprep.subr.mxu0 0.0
        %765 = vmatpush1.xpose.msra.mxu0 0.0
        %766 = vmatprep.subr.mxu0 0.0
        %767 = vmatpush1.xpose.msra.mxu0 0.0
        %768 = vmatprep.subr.mxu0 0.0
        %769 = vmatpush1.xpose.msra.mxu0 0.0
        %770 = vmatprep.subr.mxu0 0.0
        %771 = vmatpush1.xpose.msra.mxu0 0.0
        %772 = vmatprep.subr.mxu0 0.0
        %773 = vmatpush1.xpose.msra.mxu0 0.0
        %774 = vmatprep.subr.mxu0 0.0
        %775 = vmatpush1.xpose.msra.mxu0 %v742
        %776 = vmatprep.subr.mxu0 0.0
        %777 = vmatpush2.xpose.msra.mxu0 0.0
        %778 = vmatprep.subr.mxu0 0.0
        %779 = vmatpush2.xpose.msra.mxu0 0.0
        %780 = vmatprep.subr.mxu0 0.0
        %781 = vmatpush2.xpose.msra.mxu0 0.0
        %782 = vmatprep.subr.mxu0 0.0
        %783 = vmatpush2.xpose.msra.mxu0 0.0
        %784 = vmatprep.subr.mxu0 0.0
        %785 = vmatpush2.xpose.msra.mxu0 0.0
        %786 = vmatprep.subr.mxu0 0.0
        %787 = vmatpush2.xpose.msra.mxu0 0.0
        %788 = vmatprep.subr.mxu0 0.0
        %789 = vmatpush2.xpose.msra.mxu0 0.0
        %790 = vmatprep.subr.mxu0 0.0
        %791 = vmatpush2.xpose.msra.mxu0 0.0
        %792 = vmatprep.subr.mxu0 0.0
        %793 = vmatpush2.xpose.msra.mxu0 0.0
        %794 = vmatprep.subr.mxu0 0.0
        %795 = vmatpush2.xpose.msra.mxu0 0.0
        %796 = vmatprep.subr.mxu0 0.0
        %797 = vmatpush2.xpose.msra.mxu0 0.0
        %798 = vmatprep.subr.mxu0 0.0
        %799 = vmatpush2.xpose.msra.mxu0 0.0
        %800 = vmatprep.subr.mxu0 0.0
        %801 = vmatpush2.xpose.msra.mxu0 0.0
        %802 = vmatprep.subr.mxu0 0.0
        %803 = vmatpush2.xpose.msra.mxu0 0.0
        %804 = vmatprep.subr.mxu0 0.0
        %805 = vmatpush2.xpose.msra.mxu0 0.0
        %806 = vmatprep.subr.mxu0 0.0
        %807 = vmatpush2.xpose.msra.mxu0 0.0
        %808 = vmatprep.mubr.f32.mxu0 0.0
        %809 = vmatmul.mubr.f32.gmra.mxu0 %v740
        %v810 = vpop.f32.mrf.mxu0
        %v811 = vadd.f32 0.0, %v810
        %v812 = vpop.f32.mrf.mxu0
        %813 = vdwg.mxu0
        %v814 = vld [vmem:[%s314] sm:$0x1]
        %v816 = vlaneseq
        %v817 = vshrl.u32 %v816, 7
        %v818 = vsub.s32 0, %v817
        %v819 = vrot.slane %v814, %v818
        %v821 = vadd.f32 %v577, %v819
        %v822 = vadd.f32 %v655, %v819
        %v823 = vadd.f32 %v733, %v819
        %v824 = vadd.f32 %v811, %v819
        %vm825 = vcmask 64512
        %v826 = vsel %vm825, %v821, -inf
        %827 = vmax.xlane.f32.xlu0 %v826
        %v828 = vpop.xlane.xlu0 %827
        %v829 = vsel %vm825, %v822, -inf
        %830 = vmax.xlane.f32.xlu0 %v829
        %v831 = vpop.xlane.xlu0 %830
        %v832 = vsel %vm825, %v823, -inf
        %833 = vmax.xlane.f32.xlu0 %v832
        %v834 = vpop.xlane.xlu0 %833
        %v835 = vsel %vm825, %v824, -inf
        %836 = vmax.xlane.f32.xlu0 %v835
        %v837 = vpop.xlane.xlu0 %836
        %v838 = vsub.f32 %v821, %v828
        %v839 = vsub.f32 %v822, %v831
        %v840 = vsub.f32 %v823, %v834
        %v841 = vsub.f32 %v824, %v837
        %v842 = vmul.f32 %v838, 1.442695
        %v843 = vpow.pop %v842
        %v844 = vmul.f32 %v839, 1.442695
        %v845 = vpow.pop %v844
        %v846 = vmul.f32 %v840, 1.442695
        %v847 = vpow.pop %v846
        %v848 = vmul.f32 %v841, 1.442695
        %v849 = vpow.pop %v848
        %v850 = vsel %vm825, %v843, 0.0
        %851 = vadd.xlane.f32.xlu0 %v850
        %v852 = vpop.xlane.xlu0 %851
        %v853 = vsel %vm825, %v845, 0.0
        %854 = vadd.xlane.f32.xlu0 %v853
        %v855 = vpop.xlane.xlu0 %854
        %v856 = vsel %vm825, %v847, 0.0
        %857 = vadd.xlane.f32.xlu0 %v856
        %v858 = vpop.xlane.xlu0 %857
        %v859 = vsel %vm825, %v849, 0.0
        %860 = vadd.xlane.f32.xlu0 %v859
        %v861 = vpop.xlane.xlu0 %860
        %v862 = vrcp.pop %v852
        %v863 = vrcp.pop %v855
        %v864 = vrcp.pop %v858
        %v865 = vrcp.pop %v861
        %v866 = vmul.f32 %v852, %v862
        %v867 = vmul.f32 %v855, %v863
        %v868 = vmul.f32 %v858, %v864
        %v869 = vmul.f32 %v861, %v865
        %v870 = vsub.f32 2.0, %v866
        %v871 = vsub.f32 2.0, %v867
        %v872 = vsub.f32 2.0, %v868
        %v873 = vsub.f32 2.0, %v869
        %v874 = vmul.f32 %v862, %v870
        %v875 = vmul.f32 %v863, %v871
        %v876 = vmul.f32 %v864, %v872
        %v877 = vmul.f32 %v865, %v873
        %v878 = vmul.f32 %v843, %v874
        %v879 = vmul.f32 %v845, %v875
        %v880 = vmul.f32 %v847, %v876
        %v881 = vmul.f32 %v849, %v877
        %v883 = vsel %vm825, %v878, 0
        %885 = vmatprep.subr.mxu0 0.0
        %886 = vmatpush1.msra.mxu0 0.0
        %887 = vmatprep.subr.mxu0 0.0
        %888 = vmatpush1.msra.mxu0 0.0
        %889 = vmatprep.subr.mxu0 0.0
        %890 = vmatpush1.msra.mxu0 0.0
        %891 = vmatprep.subr.mxu0 0.0
        %892 = vmatpush1.msra.mxu0 0.0
        %893 = vmatprep.subr.mxu0 0.0
        %894 = vmatpush1.msra.mxu0 0.0
        %895 = vmatprep.subr.mxu0 0.0
        %896 = vmatpush1.msra.mxu0 0.0
        %897 = vmatprep.subr.mxu0 0.0
        %898 = vmatpush1.msra.mxu0 0.0
        %899 = vmatprep.subr.mxu0 0.0
        %900 = vmatpush1.msra.mxu0 0.0
        %901 = vmatprep.subr.mxu0 0.0
        %902 = vmatpush1.msra.mxu0 0.0
        %903 = vmatprep.subr.mxu0 0.0
        %904 = vmatpush1.msra.mxu0 0.0
        %905 = vmatprep.subr.mxu0 0.0
        %906 = vmatpush1.msra.mxu0 0.0
        %907 = vmatprep.subr.mxu0 0.0
        %908 = vmatpush1.msra.mxu0 0.0
        %909 = vmatprep.subr.mxu0 0.0
        %910 = vmatpush1.msra.mxu0 0.0
        %911 = vmatprep.subr.mxu0 0.0
        %912 = vmatpush1.msra.mxu0 0.0
        %913 = vmatprep.subr.mxu0 0.0
        %914 = vmatpush1.msra.mxu0 0.0
        %915 = vmatprep.subr.mxu0 0.0
        %916 = vmatpush1.msra.mxu0 %v502
        %917 = vmatprep.subr.mxu0 0.0
        %918 = vmatpush2.msra.mxu0 0.0
        %919 = vmatprep.subr.mxu0 0.0
        %920 = vmatpush2.msra.mxu0 0.0
        %921 = vmatprep.subr.mxu0 0.0
        %922 = vmatpush2.msra.mxu0 0.0
        %923 = vmatprep.subr.mxu0 0.0
        %924 = vmatpush2.msra.mxu0 0.0
        %925 = vmatprep.subr.mxu0 0.0
        %926 = vmatpush2.msra.mxu0 0.0
        %927 = vmatprep.subr.mxu0 0.0
        %928 = vmatpush2.msra.mxu0 0.0
        %929 = vmatprep.subr.mxu0 0.0
        %930 = vmatpush2.msra.mxu0 0.0
        %931 = vmatprep.subr.mxu0 0.0
        %932 = vmatpush2.msra.mxu0 0.0
        %933 = vmatprep.subr.mxu0 0.0
        %934 = vmatpush2.msra.mxu0 0.0
        %935 = vmatprep.subr.mxu0 0.0
        %936 = vmatpush2.msra.mxu0 0.0
        %937 = vmatprep.subr.mxu0 0.0
        %938 = vmatpush2.msra.mxu0 0.0
        %939 = vmatprep.subr.mxu0 0.0
        %940 = vmatpush2.msra.mxu0 0.0
        %941 = vmatprep.subr.mxu0 0.0
        %942 = vmatpush2.msra.mxu0 0.0
        %943 = vmatprep.subr.mxu0 0.0
        %944 = vmatpush2.msra.mxu0 0.0
        %945 = vmatprep.subr.mxu0 0.0
        %946 = vmatpush2.msra.mxu0 0.0
        %947 = vmatprep.subr.mxu0 0.0
        %948 = vmatpush2.msra.mxu0 0.0
        %949 = vmatprep.mubr.f32.mxu0 0.0
        %950 = vmatmul.mubr.f32.gmra.mxu0 %v883
        %v951 = vpop.f32.mrf.mxu0
        %v952 = vadd.f32 0.0, %v951
        %v953 = vpop.f32.mrf.mxu0
        %954 = vdwg.mxu0
        %956 = vrot.lane.b32.xlu0 %v502, 124
        %v957 = vpop.permute.xlu0 %956
        %v960 = vsel %vm825, %v879, 0
        %962 = vmatprep.subr.mxu0 0.0
        %963 = vmatpush1.msra.mxu0 0.0
        %964 = vmatprep.subr.mxu0 0.0
        %965 = vmatpush1.msra.mxu0 0.0
        %966 = vmatprep.subr.mxu0 0.0
        %967 = vmatpush1.msra.mxu0 0.0
        %968 = vmatprep.subr.mxu0 0.0
        %969 = vmatpush1.msra.mxu0 0.0
        %970 = vmatprep.subr.mxu0 0.0
        %971 = vmatpush1.msra.mxu0 0.0
        %972 = vmatprep.subr.mxu0 0.0
        %973 = vmatpush1.msra.mxu0 0.0
        %974 = vmatprep.subr.mxu0 0.0
        %975 = vmatpush1.msra.mxu0 0.0
        %976 = vmatprep.subr.mxu0 0.0
        %977 = vmatpush1.msra.mxu0 0.0
        %978 = vmatprep.subr.mxu0 0.0
        %979 = vmatpush1.msra.mxu0 0.0
        %980 = vmatprep.subr.mxu0 0.0
        %981 = vmatpush1.msra.mxu0 0.0
        %982 = vmatprep.subr.mxu0 0.0
        %983 = vmatpush1.msra.mxu0 0.0
        %984 = vmatprep.subr.mxu0 0.0
        %985 = vmatpush1.msra.mxu0 0.0
        %986 = vmatprep.subr.mxu0 0.0
        %987 = vmatpush1.msra.mxu0 0.0
        %988 = vmatprep.subr.mxu0 0.0
        %989 = vmatpush1.msra.mxu0 0.0
        %990 = vmatprep.subr.mxu0 0.0
        %991 = vmatpush1.msra.mxu0 0.0
        %992 = vmatprep.subr.mxu0 0.0
        %993 = vmatpush1.msra.mxu0 %v957
        %994 = vmatprep.subr.mxu0 0.0
        %995 = vmatpush2.msra.mxu0 0.0
        %996 = vmatprep.subr.mxu0 0.0
        %997 = vmatpush2.msra.mxu0 0.0
        %998 = vmatprep.subr.mxu0 0.0
        %999 = vmatpush2.msra.mxu0 0.0
        %1000 = vmatprep.subr.mxu0 0.0
        %1001 = vmatpush2.msra.mxu0 0.0
        %1002 = vmatprep.subr.mxu0 0.0
        %1003 = vmatpush2.msra.mxu0 0.0
        %1004 = vmatprep.subr.mxu0 0.0
        %1005 = vmatpush2.msra.mxu0 0.0
        %1006 = vmatprep.subr.mxu0 0.0
        %1007 = vmatpush2.msra.mxu0 0.0
        %1008 = vmatprep.subr.mxu0 0.0
        %1009 = vmatpush2.msra.mxu0 0.0
        %1010 = vmatprep.subr.mxu0 0.0
        %1011 = vmatpush2.msra.mxu0 0.0
        %1012 = vmatprep.subr.mxu0 0.0
        %1013 = vmatpush2.msra.mxu0 0.0
        %1014 = vmatprep.subr.mxu0 0.0
        %1015 = vmatpush2.msra.mxu0 0.0
        %1016 = vmatprep.subr.mxu0 0.0
        %1017 = vmatpush2.msra.mxu0 0.0
        %1018 = vmatprep.subr.mxu0 0.0
        %1019 = vmatpush2.msra.mxu0 0.0
        %1020 = vmatprep.subr.mxu0 0.0
        %1021 = vmatpush2.msra.mxu0 0.0
        %1022 = vmatprep.subr.mxu0 0.0
        %1023 = vmatpush2.msra.mxu0 0.0
        %1024 = vmatprep.subr.mxu0 0.0
        %1025 = vmatpush2.msra.mxu0 0.0
        %1026 = vmatprep.mubr.f32.mxu0 0.0
        %1027 = vmatmul.mubr.f32.gmra.mxu0 %v960
        %v1028 = vpop.f32.mrf.mxu0
        %v1029 = vadd.f32 0.0, %v1028
        %v1030 = vpop.f32.mrf.mxu0
        %1031 = vdwg.mxu0
        %1032 = vrot.lane.b32.xlu0 %v502, 120
        %v1033 = vpop.permute.xlu0 %1032
        %v1036 = vsel %vm825, %v880, 0
        %1038 = vmatprep.subr.mxu0 0.0
        %1039 = vmatpush1.msra.mxu0 0.0
        %1040 = vmatprep.subr.mxu0 0.0
        %1041 = vmatpush1.msra.mxu0 0.0
        %1042 = vmatprep.subr.mxu0 0.0
        %1043 = vmatpush1.msra.mxu0 0.0
        %1044 = vmatprep.subr.mxu0 0.0
        %1045 = vmatpush1.msra.mxu0 0.0
        %1046 = vmatprep.subr.mxu0 0.0
        %1047 = vmatpush1.msra.mxu0 0.0
        %1048 = vmatprep.subr.mxu0 0.0
        %1049 = vmatpush1.msra.mxu0 0.0
        %1050 = vmatprep.subr.mxu0 0.0
        %1051 = vmatpush1.msra.mxu0 0.0
        %1052 = vmatprep.subr.mxu0 0.0
        %1053 = vmatpush1.msra.mxu0 0.0
        %1054 = vmatprep.subr.mxu0 0.0
        %1055 = vmatpush1.msra.mxu0 0.0
        %1056 = vmatprep.subr.mxu0 0.0
        %1057 = vmatpush1.msra.mxu0 0.0
        %1058 = vmatprep.subr.mxu0 0.0
        %1059 = vmatpush1.msra.mxu0 0.0
        %1060 = vmatprep.subr.mxu0 0.0
        %1061 = vmatpush1.msra.mxu0 0.0
        %1062 = vmatprep.subr.mxu0 0.0
        %1063 = vmatpush1.msra.mxu0 0.0
        %1064 = vmatprep.subr.mxu0 0.0
        %1065 = vmatpush1.msra.mxu0 0.0
        %1066 = vmatprep.subr.mxu0 0.0
        %1067 = vmatpush1.msra.mxu0 0.0
        %1068 = vmatprep.subr.mxu0 0.0
        %1069 = vmatpush1.msra.mxu0 %v1033
        %1070 = vmatprep.subr.mxu0 0.0
        %1071 = vmatpush2.msra.mxu0 0.0
        %1072 = vmatprep.subr.mxu0 0.0
        %1073 = vmatpush2.msra.mxu0 0.0
        %1074 = vmatprep.subr.mxu0 0.0
        %1075 = vmatpush2.msra.mxu0 0.0
        %1076 = vmatprep.subr.mxu0 0.0
        %1077 = vmatpush2.msra.mxu0 0.0
        %1078 = vmatprep.subr.mxu0 0.0
        %1079 = vmatpush2.msra.mxu0 0.0
        %1080 = vmatprep.subr.mxu0 0.0
        %1081 = vmatpush2.msra.mxu0 0.0
        %1082 = vmatprep.subr.mxu0 0.0
        %1083 = vmatpush2.msra.mxu0 0.0
        %1084 = vmatprep.subr.mxu0 0.0
        %1085 = vmatpush2.msra.mxu0 0.0
        %1086 = vmatprep.subr.mxu0 0.0
        %1087 = vmatpush2.msra.mxu0 0.0
        %1088 = vmatprep.subr.mxu0 0.0
        %1089 = vmatpush2.msra.mxu0 0.0
        %1090 = vmatprep.subr.mxu0 0.0
        %1091 = vmatpush2.msra.mxu0 0.0
        %1092 = vmatprep.subr.mxu0 0.0
        %1093 = vmatpush2.msra.mxu0 0.0
        %1094 = vmatprep.subr.mxu0 0.0
        %1095 = vmatpush2.msra.mxu0 0.0
        %1096 = vmatprep.subr.mxu0 0.0
        %1097 = vmatpush2.msra.mxu0 0.0
        %1098 = vmatprep.subr.mxu0 0.0
        %1099 = vmatpush2.msra.mxu0 0.0
        %1100 = vmatprep.subr.mxu0 0.0
        %1101 = vmatpush2.msra.mxu0 0.0
        %1102 = vmatprep.mubr.f32.mxu0 0.0
        %1103 = vmatmul.mubr.f32.gmra.mxu0 %v1036
        %v1104 = vpop.f32.mrf.mxu0
        %v1105 = vadd.f32 0.0, %v1104
        %v1106 = vpop.f32.mrf.mxu0
        %1107 = vdwg.mxu0
        %1108 = vrot.lane.b32.xlu0 %v502, 116
        %v1109 = vpop.permute.xlu0 %1108
        %v1112 = vsel %vm825, %v881, 0
        %1114 = vmatprep.subr.mxu0 0.0
        %1115 = vmatpush1.msra.mxu0 0.0
        %1116 = vmatprep.subr.mxu0 0.0
        %1117 = vmatpush1.msra.mxu0 0.0
        %1118 = vmatprep.subr.mxu0 0.0
        %1119 = vmatpush1.msra.mxu0 0.0
        %1120 = vmatprep.subr.mxu0 0.0
        %1121 = vmatpush1.msra.mxu0 0.0
        %1122 = vmatprep.subr.mxu0 0.0
        %1123 = vmatpush1.msra.mxu0 0.0
        %1124 = vmatprep.subr.mxu0 0.0
        %1125 = vmatpush1.msra.mxu0 0.0
        %1126 = vmatprep.subr.mxu0 0.0
        %1127 = vmatpush1.msra.mxu0 0.0
        %1128 = vmatprep.subr.mxu0 0.0
        %1129 = vmatpush1.msra.mxu0 0.0
        %1130 = vmatprep.subr.mxu0 0.0
        %1131 = vmatpush1.msra.mxu0 0.0
        %1132 = vmatprep.subr.mxu0 0.0
        %1133 = vmatpush1.msra.mxu0 0.0
        %1134 = vmatprep.subr.mxu0 0.0
        %1135 = vmatpush1.msra.mxu0 0.0
        %1136 = vmatprep.subr.mxu0 0.0
        %1137 = vmatpush1.msra.mxu0 0.0
        %1138 = vmatprep.subr.mxu0 0.0
        %1139 = vmatpush1.msra.mxu0 0.0
        %1140 = vmatprep.subr.mxu0 0.0
        %1141 = vmatpush1.msra.mxu0 0.0
        %1142 = vmatprep.subr.mxu0 0.0
        %1143 = vmatpush1.msra.mxu0 0.0
        %1144 = vmatprep.subr.mxu0 0.0
        %1145 = vmatpush1.msra.mxu0 %v1109
        %1146 = vmatprep.subr.mxu0 0.0
        %1147 = vmatpush2.msra.mxu0 0.0
        %1148 = vmatprep.subr.mxu0 0.0
        %1149 = vmatpush2.msra.mxu0 0.0
        %1150 = vmatprep.subr.mxu0 0.0
        %1151 = vmatpush2.msra.mxu0 0.0
        %1152 = vmatprep.subr.mxu0 0.0
        %1153 = vmatpush2.msra.mxu0 0.0
        %1154 = vmatprep.subr.mxu0 0.0
        %1155 = vmatpush2.msra.mxu0 0.0
        %1156 = vmatprep.subr.mxu0 0.0
        %1157 = vmatpush2.msra.mxu0 0.0
        %1158 = vmatprep.subr.mxu0 0.0
        %1159 = vmatpush2.msra.mxu0 0.0
        %1160 = vmatprep.subr.mxu0 0.0
        %1161 = vmatpush2.msra.mxu0 0.0
        %1162 = vmatprep.subr.mxu0 0.0
        %1163 = vmatpush2.msra.mxu0 0.0
        %1164 = vmatprep.subr.mxu0 0.0
        %1165 = vmatpush2.msra.mxu0 0.0
        %1166 = vmatprep.subr.mxu0 0.0
        %1167 = vmatpush2.msra.mxu0 0.0
        %1168 = vmatprep.subr.mxu0 0.0
        %1169 = vmatpush2.msra.mxu0 0.0
        %1170 = vmatprep.subr.mxu0 0.0
        %1171 = vmatpush2.msra.mxu0 0.0
        %1172 = vmatprep.subr.mxu0 0.0
        %1173 = vmatpush2.msra.mxu0 0.0
        %1174 = vmatprep.subr.mxu0 0.0
        %1175 = vmatpush2.msra.mxu0 0.0
        %1176 = vmatprep.subr.mxu0 0.0
        %1177 = vmatpush2.msra.mxu0 0.0
        %1178 = vmatprep.mubr.f32.mxu0 0.0
        %1179 = vmatmul.mubr.f32.gmra.mxu0 %v1112
        %v1180 = vpop.f32.mrf.mxu0
        %v1181 = vadd.f32 0.0, %v1180
        %v1182 = vpop.f32.mrf.mxu0
        %1183 = vdwg.mxu0
        %1185 = vrot.lane.b32.xlu0 %v1029, 4
        %v1186 = vpop.permute.xlu0 %1185
        %1189 = vrot.lane.b32.xlu0 %v1105, 8
        %v1190 = vpop.permute.xlu0 %1189
        %1193 = vrot.lane.b32.xlu0 %v1181, 12
        %v1194 = vpop.permute.xlu0 %1193
        %v1196 = vsel %vm503, %v952, %v1186
        %v1197 = vsel %vm825, %v1196, %v1190
        %vm1198 = vcmask 97280
        %v1199 = vsel %vm1198, %v1197, %v1194
        %vm1200 = vcmask 130048
        %1201 = vst.msk [vmem:[%s300] sm:$0xff] %vm1200, %v1199
        %1202 = vst.msk [vmem:[%s307] sm:$0xff] %vm825, %v821
        %1203 = vst.msk [vmem:[%s307 + $0x8] sm:$0xff] %vm825, %v822
        %1204 = vst.msk [vmem:[%s307 + $0x10] sm:$0xff] %vm825, %v823
        %1205 = vst.msk [vmem:[%s307 + $0x18] sm:$0xff] %vm825, %v824
        %s1206 = sand.u32 %s183, 1
        %s1207 = scalar_lea.sflag [#allocation5], %s1206
        %s1208 = sand.u32 %s183, 1
        %s1209 = smul.addr %s1208, 8
        %s1210 = scalar_lea.vmem [#allocation4], %s1209
        %s1211 = sand.u32 %s211, 1
        %s1212 = scalar_lea.sflag [#allocation7], %s1211
        %s1213 = sand.u32 %s211, 1
        %s1214 = smul.addr %s1213, 32
        %s1215 = scalar_lea.vmem [#allocation6], %s1214
        // Predicated region
        $region49: #{tpu_custom_call.1} parent=43 // pred_check
          %p1216 = pneg %p193
        $region50: #{tpu_custom_call.1} parent=43 // pred_check_branch
          %1218 = sbr.rel (%p1216) target = $region52
        $region51: #{tpu_custom_call.1} parent=43 // pred_region
          %s1220 = ssub.s32 128, 128
          %1221 = vsyncadd %s1207, %s1220
          %s1222 = sadd.s32 %s30, %s29
          %s1223 = smul.addr %s1222, 128
          %s1224 = scalar_lea.hbm %s6, %s1223
          %s1226 = sshll.u32 %s1210, 4
          %s1227 = int_to_ptr.vmem [resolvable:$true] %s1226
          %1229 = dma.vmem_to_hbm [thread:$0]  %s1227, 128, %s1224, %s1207
        $region52: #{tpu_custom_call.1} parent=43 // pred_fallthru
          _
        // Predicated region
        $region53: #{tpu_custom_call.1} parent=43 // pred_check
          %p1230 = pneg %p221
        $region54: #{tpu_custom_call.1} parent=43 // pred_check_branch
          %1232 = sbr.rel (%p1230) target = $region56
        $region55: #{tpu_custom_call.1} parent=43 // pred_region
          %s1234 = ssub.s32 512, 512
          %1235 = vsyncadd %s1212, %s1234
          %s1236 = smul.addr %s29, 4
          %s1237 = sadd.s32 %s30, %s1236
          %s1238 = smul.addr %s1237, 128
          %s1239 = scalar_lea.hbm %s7, %s1238
          %s1240 = sshll.u32 %s1215, 4
          %s1241 = int_to_ptr.vmem [resolvable:$true] %s1240
          %1246 = dma.vmem_to_hbm [thread:$0]  %s1241, 512, %s1239, %s1212, 128, 128, 8
        $region56: #{tpu_custom_call.1} parent=43 // pred_fallthru
          _
      $region44: #{tpu_custom_call.1} parent=5 // pred_fallthru
        _
      %p1247 = scmp.le.s32.totalorder 2, %s20
      // Predicated region
      $region57: #{tpu_custom_call.1} parent=5 // pred_check
        %p1248 = pneg %p1247
      $region58: #{tpu_custom_call.1} parent=5 // pred_check_branch
        %1250 = sbr.rel (%p1248) target = $region60
      $region59: #{tpu_custom_call.1} parent=5 // pred_region
        %s1251 = ssub.s32 %s20, 2
        // Predicated region
        $region61: #{tpu_custom_call.1} parent=59 // pred_check
          %p1252 = pneg %p199
        $region62: #{tpu_custom_call.1} parent=59 // pred_check_branch
          %1254 = sbr.rel (%p1252) target = $region64
        $region63: #{tpu_custom_call.1} parent=59 // pred_region
          %s1255 = sand.u32 %s184, 1
          %s1256 = scalar_lea.sflag [#allocation5], %s1255
          %s1257 = sand.u32 %s184, 1
          %s1258 = smul.addr %s1257, 8
          %s1259 = scalar_lea.vmem [#allocation4], %s1258
          %1260 = dma.done %s1256, 128
        $region64: #{tpu_custom_call.1} parent=59 // pred_fallthru
          _
        // Predicated region
        $region65: #{tpu_custom_call.1} parent=59 // pred_check
          %p1261 = pneg %p227
        $region66: #{tpu_custom_call.1} parent=59 // pred_check_branch
          %1263 = sbr.rel (%p1261) target = $region68
        $region67: #{tpu_custom_call.1} parent=59 // pred_region
          %s1264 = sand.u32 %s212, 1
          %s1265 = scalar_lea.sflag [#allocation7], %s1264
          %s1266 = sand.u32 %s212, 1
          %s1267 = smul.addr %s1266, 32
          %s1268 = scalar_lea.vmem [#allocation6], %s1267
          %1269 = dma.done %s1265, 512
        $region68: #{tpu_custom_call.1} parent=59 // pred_fallthru
          _
      $region60: #{tpu_custom_call.1} parent=5 // pred_fallthru
        _
    $region6: #{tpu_custom_call.1} parent=1 // loop_footer
      %s24 = sadd.s32 1, %s20
    $region7: #{tpu_custom_call.1} parent=1 // loop_footer_branch
      %19 = sbr.rel target = $region3
    $region8: #{tpu_custom_call.1} parent=1 // loop_exit
      _
    %1270 = vsyncpa [#allocation5], 1
    %s1271 = scalar_lea.sflag [#allocation5], 1
    %1272 = vsyncpa %s1271, 1
    %1273 = vsyncpa [#allocation7], 1
    %s1274 = scalar_lea.sflag [#allocation7], 1
    %1275 = vsyncpa %s1274, 1

</llo_original>
